<compile_context>
chip_gen: v5e
topology: v5e:2x2
jax: 0.10.0
libtpu: 0.0.40
codegen_flags: <defaults>
</compile_context>

<pallas_src>
import jax
import jax.numpy as jnp
from jax.experimental import pallas as pl
from jax.experimental.pallas import tpu as pltpu

# ------------------------- model configuration -------------------------
B = 2            # batch
S = 8            # sequence length
H = 32           # hidden size
NUM_HEADS = 2
HEAD_DIM = H // NUM_HEADS
INTERMEDIATE = 64
NUM_LAYERS = 2
VOCAB = 100
TYPE_VOCAB = 2
MAX_POS = 16
NUM_CLASSES = 2
LOGITS_PAD = 128          # lane-dense padded logits width
EPS = 1e-12
F32 = jnp.float32
BF16 = jnp.bfloat16


# ------------------------- in-kernel helpers -------------------------
def _layernorm(x, gamma, beta):
    mu = jnp.mean(x, axis=-1, keepdims=True)
    var = jnp.mean((x - mu) * (x - mu), axis=-1, keepdims=True)
    return (x - mu) * jax.lax.rsqrt(var + EPS) * gamma + beta


def _gelu(x):
    # TODO(synk): HF BERT default uses exact erf-GELU; tanh approximation kept
    # for guaranteed Mosaic lowering (small systematic numeric deviation).
    c = 0.7978845608028654  # sqrt(2/pi)
    return 0.5 * x * (1.0 + jnp.tanh(c * (x + 0.044715 * x * x * x)))


# ------------------------- fused backbone + head kernel -------------------------
def fused_model_kernel(emb_ref, mask_ref, misc_ref,
                       wqkv_ref, wo_ref, w1_ref, w2_ref, lvec_ref,
                       wp_ref, wc_ref, out_ref):
    """Embedding-LN + all encoder layers + pooler + classifier in one invocation."""
    scale = 1.0 / (HEAD_DIM ** 0.5)

    misc = misc_ref[...]                       # (8, 128) f32 packed vectors
    emb_g = misc[0:1, :H]
    emb_b = misc[1:2, :H]
    pool_b = misc[2:3, :H]
    cls_b = misc[3:4, :]                       # (1, 128)

    neg_mask = mask_ref[...]                   # (B, 1, S) additive mask (precomputed)
    x = _layernorm(emb_ref[...], emb_g, emb_b)  # (B*S, H) f32, stays resident

    # Statically unrolled layer loop (equivalent to fori_loop(unroll=True) at L=2);
    # stacked weights are indexed with static layer ids — no per-layer grid steps.
    for l in range(NUM_LAYERS):
        wqkv = wqkv_ref[l]                     # (H, 3H) bf16
        wo = wo_ref[l]                         # (H, H)  bf16
        w1 = w1_ref[l]                         # (H, I)  bf16
        w2 = w2_ref[l]                         # (I, H)  bf16
        lv = lvec_ref[l]                       # (8, 128) f32 packed per-layer vectors
        bqkv = lv[0:1, :3 * H]
        bo = lv[1:2, :H]
        ln1g = lv[2:3, :H]
        ln1b = lv[3:4, :H]
        b1 = lv[4:5, :INTERMEDIATE]
        b2 = lv[5:6, :H]
        ln2g = lv[6:7, :H]
        ln2b = lv[7:8, :H]

        # ---- fused QKV projection: bf16 operands, f32 accumulate ----
        qkv = jnp.dot(x.astype(BF16), wqkv, preferred_element_type=F32) + bqkv

        # ---- per-head attention; output projection fused per head (no concat) ----
        attn = jnp.zeros((B * S, H), F32)
        for h in range(NUM_HEADS):
            off = h * HEAD_DIM
            q_h = qkv[:, off:off + HEAD_DIM].reshape(B, S, HEAD_DIM)
            k_h = qkv[:, H + off:H + off + HEAD_DIM].reshape(B, S, HEAD_DIM)
            v_h = qkv[:, 2 * H + off:2 * H + off + HEAD_DIM].reshape(B, S, HEAD_DIM)
            s = jnp.einsum('bqd,bkd->bqk', q_h.astype(BF16), k_h.astype(BF16),
                           preferred_element_type=F32) * scale + neg_mask
            s = s - jnp.max(s, axis=-1, keepdims=True)
            p = jnp.exp(s)
            p = p * pl.reciprocal(jnp.sum(p, axis=-1, keepdims=True), approx=True)
            ctx = jnp.einsum('bqk,bkd->bqd', p.astype(BF16), v_h.astype(BF16),
                             preferred_element_type=F32)          # (B, S, HD)
            attn = attn + jnp.dot(ctx.reshape(B * S, HEAD_DIM).astype(BF16),
                                  wo[off:off + HEAD_DIM, :],
                                  preferred_element_type=F32)
        h1 = _layernorm(x + attn + bo, ln1g, ln1b)

        # ---- FFN over flattened (B*S, H) ----
        ff = _gelu(jnp.dot(h1.astype(BF16), w1, preferred_element_type=F32) + b1)
        ff = jnp.dot(ff.astype(BF16), w2, preferred_element_type=F32) + b2
        x = _layernorm(h1 + ff, ln2g, ln2b)

    # ---- tanh pooler + classifier for ALL B*S rows: the output is a dense
    # (16, 128) tile (unmasked store); the wrapper picks the CLS rows. ----
    pooled = jnp.tanh(jnp.dot(x.astype(BF16), wp_ref[...],
                              preferred_element_type=F32) + pool_b)
    out_ref[...] = jnp.dot(pooled.astype(BF16), wc_ref[...],
                           preferred_element_type=F32) + cls_b


def _vmem_spec():
    # whole array resident in VMEM; no grid / no per-step DMA bookkeeping
    return pl.BlockSpec(memory_space=pltpu.MemorySpace.VMEM)


def run_fused_model(emb2, neg_mask, p):
    args = (emb2, neg_mask, p['misc_vecs'],
            p['wqkv'], p['wo'], p['w1'], p['w2'], p['layer_vecs'],
            p['pooler_w'], p['cls_w_pad'])
    return pl.pallas_call(
        fused_model_kernel,
        out_shape=jax.ShapeDtypeStruct((B * S, LOGITS_PAD), jnp.float32),
        in_specs=[_vmem_spec() for _ in args],
        out_specs=_vmem_spec(),
    )(*args)


# ------------------------- parameter init (deterministic) -------------------------
def init_params(key):
    def dense(k, shape, dtype=jnp.float32):
        return (jax.random.normal(k, shape, jnp.float32) * 0.02).astype(dtype)

    k = jax.random.split(key, 9)
    params = {
        'word_emb': dense(k[0], (VOCAB, H)),
        'pos_emb': dense(k[1], (MAX_POS, H)),
        'type_emb': dense(k[2], (TYPE_VOCAB, H)),
        # stacked per-layer matmul weights, bf16 (f32 accumulate in-kernel)
        'wqkv': dense(k[3], (NUM_LAYERS, H, 3 * H), BF16),
        'wo': dense(k[4], (NUM_LAYERS, H, H), BF16),
        'w1': dense(k[5], (NUM_LAYERS, H, INTERMEDIATE), BF16),
        'w2': dense(k[6], (NUM_LAYERS, INTERMEDIATE, H), BF16),
        'pooler_w': dense(k[7], (H, H), BF16),
    }
    # classifier weight zero-padded to 128 output lanes (lane-dense store)
    cls_w = dense(k[8], (H, NUM_CLASSES))
    params['cls_w_pad'] = (jnp.zeros((H, LOGITS_PAD), jnp.float32)
                           .at[:, :NUM_CLASSES].set(cls_w).astype(BF16))

    # packed per-layer small vectors: one (L, 8, 128) tensor == one DMA each.
    lvec = jnp.zeros((NUM_LAYERS, 8, 128), jnp.float32)
    lvec = lvec.at[:, 0, :3 * H].set(jnp.zeros((NUM_LAYERS, 3 * H)))       # bqkv
    lvec = lvec.at[:, 1, :H].set(jnp.zeros((NUM_LAYERS, H)))               # bo
    lvec = lvec.at[:, 2, :H].set(jnp.ones((NUM_LAYERS, H)))                # ln1 gamma
    lvec = lvec.at[:, 3, :H].set(jnp.zeros((NUM_LAYERS, H)))               # ln1 beta
    lvec = lvec.at[:, 4, :INTERMEDIATE].set(jnp.zeros((NUM_LAYERS, INTERMEDIATE)))  # b1
    lvec = lvec.at[:, 5, :H].set(jnp.zeros((NUM_LAYERS, H)))               # b2
    lvec = lvec.at[:, 6, :H].set(jnp.ones((NUM_LAYERS, H)))                # ln2 gamma
    lvec = lvec.at[:, 7, :H].set(jnp.zeros((NUM_LAYERS, H)))               # ln2 beta
    params['layer_vecs'] = lvec

    # packed embedding-LN / pooler / classifier vectors: one (8, 128) tensor.
    misc = jnp.zeros((8, 128), jnp.float32)
    misc = misc.at[0, :H].set(jnp.ones((H,)))      # embedding LN gamma
    misc = misc.at[1, :H].set(jnp.zeros((H,)))     # embedding LN beta
    misc = misc.at[2, :H].set(jnp.zeros((H,)))     # pooler bias
    misc = misc.at[3, :].set(jnp.zeros((LOGITS_PAD,)))  # classifier bias (padded)
    params['misc_vecs'] = misc
    return params


# ------------------------- forward (mirrors FullFinetuningModel.forward) -------------------------
def full_finetuning_forward(params, input_ids, attention_mask,
                            token_type_ids=None, labels=None):
    b, s = input_ids.shape
    if token_type_ids is None:
        token_type_ids = jnp.zeros_like(input_ids)

    # Embedding gathers (data-dependent, plain JAX glue); embedding LayerNorm
    # runs inside the fused kernel.
    emb = (params['word_emb'][input_ids]
           + params['pos_emb'][:s][None, :, :]
           + params['type_emb'][token_type_ids]).astype(jnp.float32)
    emb2 = emb.reshape(b * s, H)
    # additive attention mask, hoisted out of the kernel (layer-invariant)
    neg_mask = ((1.0 - attention_mask.astype(jnp.float32)) * -1e9)[:, None, :]

    # Single fused pallas_call: emb-LN + all encoder layers + pooler + classifier.
    logits_all = run_fused_model(emb2, neg_mask, params)          # (B*S, 128)
    logits = logits_all.reshape(b, s, LOGITS_PAD)[:, 0, :NUM_CLASSES]

    outputs = {'logits': logits}
    if labels is not None:
        # nn.CrossEntropyLoss (mean reduction) — tiny (B, NUM_CLASSES) reduction, JAX glue.
        logp = jax.nn.log_softmax(logits, axis=-1)
        loss = -jnp.mean(jnp.take_along_axis(logp, labels[:, None], axis=-1))
        outputs['loss'] = loss
    return outputs

# TODO(synk): HuggingFace backbone loading, parameter freezing/unfreezing and
# gradient checkpointing are training/bookkeeping concerns with no forward-pass
# compute; only the 'classification' task path is implemented.


if __name__ == "__main__":
    key = jax.random.PRNGKey(0)
    pkey, dkey1, dkey2 = jax.random.split(key, 3)
    params = init_params(pkey)

    input_ids = jax.random.randint(dkey1, (B, S), 0, VOCAB, dtype=jnp.int32)
    attention_mask = jnp.ones((B, S), jnp.int32)
    token_type_ids = jnp.zeros((B, S), jnp.int32)
    labels = jax.random.randint(dkey2, (B,), 0, NUM_CLASSES, dtype=jnp.int32)

    out = full_finetuning_forward(params, input_ids, attention_mask,
                                  token_type_ids, labels)
    jax.block_until_ready(out)
    assert out['logits'].shape == (B, NUM_CLASSES)
    assert out['loss'].shape == ()
    print("KERNEL_OK")
</pallas_src>

<mosaic_0001>
module attributes {stable_mosaic.version = 11 : i64} {
  func.func @fused_model_kernel(%arg0: memref<16x32xf32, #tpu.memory_space<vmem>>, %arg1: memref<2x1x8xf32, #tpu.memory_space<vmem>>, %arg2: memref<8x128xf32, #tpu.memory_space<vmem>>, %arg3: memref<2x32x96xbf16, #tpu.memory_space<vmem>>, %arg4: memref<2x32x32xbf16, #tpu.memory_space<vmem>>, %arg5: memref<2x32x64xbf16, #tpu.memory_space<vmem>>, %arg6: memref<2x64x32xbf16, #tpu.memory_space<vmem>>, %arg7: memref<2x8x128xf32, #tpu.memory_space<vmem>>, %arg8: memref<32x32xbf16, #tpu.memory_space<vmem>>, %arg9: memref<32x128xbf16, #tpu.memory_space<vmem>>, %arg10: memref<16x128xf32, #tpu.memory_space<vmem>>) attributes {dimension_semantics = [], scalar_prefetch = 0 : i64, scratch_operands = 0 : i64, tpu.core_type = #tpu.core_type<tc>} {
    %c0 = arith.constant 0 : index
    %c0_0 = arith.constant 0 : index
    %0 = vector.load %arg2[%c0, %c0_0] : memref<8x128xf32, #tpu.memory_space<vmem>>, vector<8x128xf32>
    %1 = vector.extract_strided_slice %0 {offsets = [0, 0], sizes = [1, 32], strides = [1, 1]} : vector<8x128xf32> to vector<1x32xf32>
    %2 = vector.extract_strided_slice %0 {offsets = [1, 0], sizes = [1, 32], strides = [1, 1]} : vector<8x128xf32> to vector<1x32xf32>
    %3 = vector.extract_strided_slice %0 {offsets = [2, 0], sizes = [1, 32], strides = [1, 1]} : vector<8x128xf32> to vector<1x32xf32>
    %4 = vector.extract_strided_slice %0 {offsets = [3, 0], sizes = [1, 128], strides = [1, 1]} : vector<8x128xf32> to vector<1x128xf32>
    %c0_1 = arith.constant 0 : index
    %c0_2 = arith.constant 0 : index
    %c0_3 = arith.constant 0 : index
    %5 = vector.load %arg1[%c0_1, %c0_2, %c0_3] : memref<2x1x8xf32, #tpu.memory_space<vmem>>, vector<2x1x8xf32>
    %c0_4 = arith.constant 0 : index
    %c0_5 = arith.constant 0 : index
    %6 = vector.load %arg0[%c0_4, %c0_5] : memref<16x32xf32, #tpu.memory_space<vmem>>, vector<16x32xf32>
    %cst = arith.constant dense<0.000000e+00> : vector<16xf32>
    %7 = vector.multi_reduction <add>, %6, %cst [1] : vector<16x32xf32> to vector<16xf32>
    %8 = vector.shape_cast %7 : vector<16xf32> to vector<16x1xf32>
    %cst_6 = arith.constant 3.200000e+01 : f32
    %9 = vector.broadcast %cst_6 : f32 to vector<16x1xf32>
    %10 = arith.divf %8, %9 : vector<16x1xf32>
    %11 = vector.broadcast %10 : vector<16x1xf32> to vector<16x32xf32>
    %12 = arith.subf %6, %11 : vector<16x32xf32>
    %13 = vector.broadcast %10 : vector<16x1xf32> to vector<16x32xf32>
    %14 = arith.subf %6, %13 : vector<16x32xf32>
    %15 = arith.mulf %12, %14 : vector<16x32xf32>
    %cst_7 = arith.constant dense<0.000000e+00> : vector<16xf32>
    %16 = vector.multi_reduction <add>, %15, %cst_7 [1] : vector<16x32xf32> to vector<16xf32>
    %17 = vector.shape_cast %16 : vector<16xf32> to vector<16x1xf32>
    %cst_8 = arith.constant 3.200000e+01 : f32
    %18 = vector.broadcast %cst_8 : f32 to vector<16x1xf32>
    %19 = arith.divf %17, %18 : vector<16x1xf32>
    %20 = vector.broadcast %10 : vector<16x1xf32> to vector<16x32xf32>
    %21 = arith.subf %6, %20 : vector<16x32xf32>
    %cst_9 = arith.constant 9.99999996E-13 : f32
    %22 = vector.broadcast %cst_9 : f32 to vector<16x1xf32>
    %23 = arith.addf %19, %22 : vector<16x1xf32>
    %24 = math.rsqrt %23 : vector<16x1xf32>
    %25 = vector.broadcast %24 : vector<16x1xf32> to vector<16x32xf32>
    %26 = arith.mulf %21, %25 : vector<16x32xf32>
    %27 = vector.broadcast %1 : vector<1x32xf32> to vector<16x32xf32>
    %28 = arith.mulf %26, %27 : vector<16x32xf32>
    %29 = vector.broadcast %2 : vector<1x32xf32> to vector<16x32xf32>
    %30 = arith.addf %28, %29 : vector<16x32xf32>
    %c0_10 = arith.constant 0 : index
    %c0_11 = arith.constant 0 : index
    %c0_12 = arith.constant 0 : index
    %31 = vector.load %arg3[%c0_10, %c0_11, %c0_12] : memref<2x32x96xbf16, #tpu.memory_space<vmem>>, vector<1x32x96xbf16>
    %32 = vector.shape_cast %31 : vector<1x32x96xbf16> to vector<32x96xbf16>
    %c0_13 = arith.constant 0 : index
    %c0_14 = arith.constant 0 : index
    %c0_15 = arith.constant 0 : index
    %33 = vector.load %arg4[%c0_13, %c0_14, %c0_15] : memref<2x32x32xbf16, #tpu.memory_space<vmem>>, vector<1x32x32xbf16>
    %34 = vector.shape_cast %33 : vector<1x32x32xbf16> to vector<32x32xbf16>
    %c0_16 = arith.constant 0 : index
    %c0_17 = arith.constant 0 : index
    %c0_18 = arith.constant 0 : index
    %35 = vector.load %arg5[%c0_16, %c0_17, %c0_18] : memref<2x32x64xbf16, #tpu.memory_space<vmem>>, vector<1x32x64xbf16>
    %36 = vector.shape_cast %35 : vector<1x32x64xbf16> to vector<32x64xbf16>
    %c0_19 = arith.constant 0 : index
    %c0_20 = arith.constant 0 : index
    %c0_21 = arith.constant 0 : index
    %37 = vector.load %arg6[%c0_19, %c0_20, %c0_21] : memref<2x64x32xbf16, #tpu.memory_space<vmem>>, vector<1x64x32xbf16>
    %38 = vector.shape_cast %37 : vector<1x64x32xbf16> to vector<64x32xbf16>
    %c0_22 = arith.constant 0 : index
    %c0_23 = arith.constant 0 : index
    %c0_24 = arith.constant 0 : index
    %39 = vector.load %arg7[%c0_22, %c0_23, %c0_24] : memref<2x8x128xf32, #tpu.memory_space<vmem>>, vector<1x8x128xf32>
    %40 = vector.shape_cast %39 : vector<1x8x128xf32> to vector<8x128xf32>
    %41 = vector.extract_strided_slice %40 {offsets = [0, 0], sizes = [1, 96], strides = [1, 1]} : vector<8x128xf32> to vector<1x96xf32>
    %42 = vector.extract_strided_slice %40 {offsets = [1, 0], sizes = [1, 32], strides = [1, 1]} : vector<8x128xf32> to vector<1x32xf32>
    %43 = vector.extract_strided_slice %40 {offsets = [2, 0], sizes = [1, 32], strides = [1, 1]} : vector<8x128xf32> to vector<1x32xf32>
    %44 = vector.extract_strided_slice %40 {offsets = [3, 0], sizes = [1, 32], strides = [1, 1]} : vector<8x128xf32> to vector<1x32xf32>
    %45 = vector.extract_strided_slice %40 {offsets = [4, 0], sizes = [1, 64], strides = [1, 1]} : vector<8x128xf32> to vector<1x64xf32>
    %46 = vector.extract_strided_slice %40 {offsets = [5, 0], sizes = [1, 32], strides = [1, 1]} : vector<8x128xf32> to vector<1x32xf32>
    %47 = vector.extract_strided_slice %40 {offsets = [6, 0], sizes = [1, 32], strides = [1, 1]} : vector<8x128xf32> to vector<1x32xf32>
    %48 = vector.extract_strided_slice %40 {offsets = [7, 0], sizes = [1, 32], strides = [1, 1]} : vector<8x128xf32> to vector<1x32xf32>
    %49 = arith.truncf %30 : vector<16x32xf32> to vector<16x32xbf16>
    %cst_25 = arith.constant dense<0.000000e+00> : vector<16x96xf32>
    %50 = tpu.matmul %49, %32, %cst_25 {dimension_numbers = #tpu.dot_dimension_numbers<[1], [0], [0], [1], [0, 0, 1, 1], [], []>} : vector<16x32xbf16>, vector<32x96xbf16>, vector<16x96xf32> -> vector<16x96xf32>
    %51 = vector.broadcast %41 : vector<1x96xf32> to vector<16x96xf32>
    %52 = arith.addf %50, %51 : vector<16x96xf32>
    %cst_26 = arith.constant 0.000000e+00 : f32
    %53 = vector.broadcast %cst_26 : f32 to vector<16x32xf32>
    %54 = vector.extract_strided_slice %52 {offsets = [0, 0], sizes = [16, 16], strides = [1, 1]} : vector<16x96xf32> to vector<16x16xf32>
    %55 = vector.shape_cast %54 : vector<16x16xf32> to vector<2x8x16xf32>
    %56 = vector.extract_strided_slice %52 {offsets = [0, 32], sizes = [16, 16], strides = [1, 1]} : vector<16x96xf32> to vector<16x16xf32>
    %57 = vector.shape_cast %56 : vector<16x16xf32> to vector<2x8x16xf32>
    %58 = vector.extract_strided_slice %52 {offsets = [0, 64], sizes = [16, 16], strides = [1, 1]} : vector<16x96xf32> to vector<16x16xf32>
    %59 = vector.shape_cast %58 : vector<16x16xf32> to vector<2x8x16xf32>
    %60 = arith.truncf %55 : vector<2x8x16xf32> to vector<2x8x16xbf16>
    %61 = arith.truncf %57 : vector<2x8x16xf32> to vector<2x8x16xbf16>
    "tpu.trace_start"() <{level = 10 : i32, message = "bqd,bkd->bqk"}> : () -> ()
    %cst_27 = arith.constant dense<0.000000e+00> : vector<2x8x8xf32>
    %62 = tpu.matmul %60, %61, %cst_27 {dimension_numbers = #tpu.dot_dimension_numbers<[2], [2], [1], [1], [0, 0, 0, 1, 1, 1], [0], [0]>} : vector<2x8x16xbf16>, vector<2x8x16xbf16>, vector<2x8x8xf32> -> vector<2x8x8xf32>
    "tpu.trace_stop"() : () -> ()
    %cst_28 = arith.constant 2.500000e-01 : f32
    %63 = vector.broadcast %cst_28 : f32 to vector<2x8x8xf32>
    %64 = arith.mulf %62, %63 : vector<2x8x8xf32>
    %65 = vector.broadcast %5 : vector<2x1x8xf32> to vector<2x8x8xf32>
    %66 = arith.addf %64, %65 : vector<2x8x8xf32>
    %cst_29 = arith.constant dense<0xFF800000> : vector<2x8xf32>
    %67 = vector.multi_reduction <maximumf>, %66, %cst_29 [2] : vector<2x8x8xf32> to vector<2x8xf32>
    %68 = vector.shape_cast %67 : vector<2x8xf32> to vector<2x8x1xf32>
    %69 = vector.broadcast %68 : vector<2x8x1xf32> to vector<2x8x8xf32>
    %70 = arith.subf %66, %69 : vector<2x8x8xf32>
    %71 = math.exp %70 : vector<2x8x8xf32>
    %cst_30 = arith.constant dense<0.000000e+00> : vector<2x8xf32>
    %72 = vector.multi_reduction <add>, %71, %cst_30 [2] : vector<2x8x8xf32> to vector<2x8xf32>
    %73 = vector.shape_cast %72 : vector<2x8xf32> to vector<2x8x1xf32>
    %74 = tpu.reciprocal %73 {approx = true} : vector<2x8x1xf32> -> vector<2x8x1xf32>
    %75 = vector.broadcast %74 : vector<2x8x1xf32> to vector<2x8x8xf32>
    %76 = arith.mulf %71, %75 : vector<2x8x8xf32>
    %77 = arith.truncf %76 : vector<2x8x8xf32> to vector<2x8x8xbf16>
    %78 = arith.truncf %59 : vector<2x8x16xf32> to vector<2x8x16xbf16>
    "tpu.trace_start"() <{level = 10 : i32, message = "bqk,bkd->bqd"}> : () -> ()
    %cst_31 = arith.constant dense<0.000000e+00> : vector<2x8x16xf32>
    %79 = tpu.matmul %77, %78, %cst_31 {dimension_numbers = #tpu.dot_dimension_numbers<[2], [1], [1], [2], [0, 0, 0, 1, 1, 2], [0], [0]>} : vector<2x8x8xbf16>, vector<2x8x16xbf16>, vector<2x8x16xf32> -> vector<2x8x16xf32>
    "tpu.trace_stop"() : () -> ()
    %80 = vector.shape_cast %79 : vector<2x8x16xf32> to vector<16x16xf32>
    %81 = arith.truncf %80 : vector<16x16xf32> to vector<16x16xbf16>
    %82 = vector.extract_strided_slice %34 {offsets = [0, 0], sizes = [16, 32], strides = [1, 1]} : vector<32x32xbf16> to vector<16x32xbf16>
    %cst_32 = arith.constant dense<0.000000e+00> : vector<16x32xf32>
    %83 = tpu.matmul %81, %82, %cst_32 {dimension_numbers = #tpu.dot_dimension_numbers<[1], [0], [0], [1], [0, 0, 1, 1], [], []>} : vector<16x16xbf16>, vector<16x32xbf16>, vector<16x32xf32> -> vector<16x32xf32>
    %84 = arith.addf %53, %83 : vector<16x32xf32>
    %85 = vector.extract_strided_slice %52 {offsets = [0, 16], sizes = [16, 16], strides = [1, 1]} : vector<16x96xf32> to vector<16x16xf32>
    %86 = vector.shape_cast %85 : vector<16x16xf32> to vector<2x8x16xf32>
    %87 = vector.extract_strided_slice %52 {offsets = [0, 48], sizes = [16, 16], strides = [1, 1]} : vector<16x96xf32> to vector<16x16xf32>
    %88 = vector.shape_cast %87 : vector<16x16xf32> to vector<2x8x16xf32>
    %89 = vector.extract_strided_slice %52 {offsets = [0, 80], sizes = [16, 16], strides = [1, 1]} : vector<16x96xf32> to vector<16x16xf32>
    %90 = vector.shape_cast %89 : vector<16x16xf32> to vector<2x8x16xf32>
    %91 = arith.truncf %86 : vector<2x8x16xf32> to vector<2x8x16xbf16>
    %92 = arith.truncf %88 : vector<2x8x16xf32> to vector<2x8x16xbf16>
    "tpu.trace_start"() <{level = 10 : i32, message = "bqd,bkd->bqk"}> : () -> ()
    %cst_33 = arith.constant dense<0.000000e+00> : vector<2x8x8xf32>
    %93 = tpu.matmul %91, %92, %cst_33 {dimension_numbers = #tpu.dot_dimension_numbers<[2], [2], [1], [1], [0, 0, 0, 1, 1, 1], [0], [0]>} : vector<2x8x16xbf16>, vector<2x8x16xbf16>, vector<2x8x8xf32> -> vector<2x8x8xf32>
    "tpu.trace_stop"() : () -> ()
    %cst_34 = arith.constant 2.500000e-01 : f32
    %94 = vector.broadcast %cst_34 : f32 to vector<2x8x8xf32>
    %95 = arith.mulf %93, %94 : vector<2x8x8xf32>
    %96 = vector.broadcast %5 : vector<2x1x8xf32> to vector<2x8x8xf32>
    %97 = arith.addf %95, %96 : vector<2x8x8xf32>
    %cst_35 = arith.constant dense<0xFF800000> : vector<2x8xf32>
    %98 = vector.multi_reduction <maximumf>, %97, %cst_35 [2] : vector<2x8x8xf32> to vector<2x8xf32>
    %99 = vector.shape_cast %98 : vector<2x8xf32> to vector<2x8x1xf32>
    %100 = vector.broadcast %99 : vector<2x8x1xf32> to vector<2x8x8xf32>
    %101 = arith.subf %97, %100 : vector<2x8x8xf32>
    %102 = math.exp %101 : vector<2x8x8xf32>
    %cst_36 = arith.constant dense<0.000000e+00> : vector<2x8xf32>
    %103 = vector.multi_reduction <add>, %102, %cst_36 [2] : vector<2x8x8xf32> to vector<2x8xf32>
    %104 = vector.shape_cast %103 : vector<2x8xf32> to vector<2x8x1xf32>
    %105 = tpu.reciprocal %104 {approx = true} : vector<2x8x1xf32> -> vector<2x8x1xf32>
    %106 = vector.broadcast %105 : vector<2x8x1xf32> to vector<2x8x8xf32>
    %107 = arith.mulf %102, %106 : vector<2x8x8xf32>
    %108 = arith.truncf %107 : vector<2x8x8xf32> to vector<2x8x8xbf16>
    %109 = arith.truncf %90 : vector<2x8x16xf32> to vector<2x8x16xbf16>
    "tpu.trace_start"() <{level = 10 : i32, message = "bqk,bkd->bqd"}> : () -> ()
    %cst_37 = arith.constant dense<0.000000e+00> : vector<2x8x16xf32>
    %110 = tpu.matmul %108, %109, %cst_37 {dimension_numbers = #tpu.dot_dimension_numbers<[2], [1], [1], [2], [0, 0, 0, 1, 1, 2], [0], [0]>} : vector<2x8x8xbf16>, vector<2x8x16xbf16>, vector<2x8x16xf32> -> vector<2x8x16xf32>
    "tpu.trace_stop"() : () -> ()
    %111 = vector.shape_cast %110 : vector<2x8x16xf32> to vector<16x16xf32>
    %112 = arith.truncf %111 : vector<16x16xf32> to vector<16x16xbf16>
    %113 = vector.extract_strided_slice %34 {offsets = [16, 0], sizes = [16, 32], strides = [1, 1]} : vector<32x32xbf16> to vector<16x32xbf16>
    %cst_38 = arith.constant dense<0.000000e+00> : vector<16x32xf32>
    %114 = tpu.matmul %112, %113, %cst_38 {dimension_numbers = #tpu.dot_dimension_numbers<[1], [0], [0], [1], [0, 0, 1, 1], [], []>} : vector<16x16xbf16>, vector<16x32xbf16>, vector<16x32xf32> -> vector<16x32xf32>
    %115 = arith.addf %84, %114 : vector<16x32xf32>
    %116 = arith.addf %30, %115 : vector<16x32xf32>
    %117 = vector.broadcast %42 : vector<1x32xf32> to vector<16x32xf32>
    %118 = arith.addf %116, %117 : vector<16x32xf32>
    %cst_39 = arith.constant dense<0.000000e+00> : vector<16xf32>
    %119 = vector.multi_reduction <add>, %118, %cst_39 [1] : vector<16x32xf32> to vector<16xf32>
    %120 = vector.shape_cast %119 : vector<16xf32> to vector<16x1xf32>
    %cst_40 = arith.constant 3.200000e+01 : f32
    %121 = vector.broadcast %cst_40 : f32 to vector<16x1xf32>
    %122 = arith.divf %120, %121 : vector<16x1xf32>
    %123 = vector.broadcast %122 : vector<16x1xf32> to vector<16x32xf32>
    %124 = arith.subf %118, %123 : vector<16x32xf32>
    %125 = vector.broadcast %122 : vector<16x1xf32> to vector<16x32xf32>
    %126 = arith.subf %118, %125 : vector<16x32xf32>
    %127 = arith.mulf %124, %126 : vector<16x32xf32>
    %cst_41 = arith.constant dense<0.000000e+00> : vector<16xf32>
    %128 = vector.multi_reduction <add>, %127, %cst_41 [1] : vector<16x32xf32> to vector<16xf32>
    %129 = vector.shape_cast %128 : vector<16xf32> to vector<16x1xf32>
    %cst_42 = arith.constant 3.200000e+01 : f32
    %130 = vector.broadcast %cst_42 : f32 to vector<16x1xf32>
    %131 = arith.divf %129, %130 : vector<16x1xf32>
    %132 = vector.broadcast %122 : vector<16x1xf32> to vector<16x32xf32>
    %133 = arith.subf %118, %132 : vector<16x32xf32>
    %cst_43 = arith.constant 9.99999996E-13 : f32
    %134 = vector.broadcast %cst_43 : f32 to vector<16x1xf32>
    %135 = arith.addf %131, %134 : vector<16x1xf32>
    %136 = math.rsqrt %135 : vector<16x1xf32>
    %137 = vector.broadcast %136 : vector<16x1xf32> to vector<16x32xf32>
    %138 = arith.mulf %133, %137 : vector<16x32xf32>
    %139 = vector.broadcast %43 : vector<1x32xf32> to vector<16x32xf32>
    %140 = arith.mulf %138, %139 : vector<16x32xf32>
    %141 = vector.broadcast %44 : vector<1x32xf32> to vector<16x32xf32>
    %142 = arith.addf %140, %141 : vector<16x32xf32>
    %143 = arith.truncf %142 : vector<16x32xf32> to vector<16x32xbf16>
    %cst_44 = arith.constant dense<0.000000e+00> : vector<16x64xf32>
    %144 = tpu.matmul %143, %36, %cst_44 {dimension_numbers = #tpu.dot_dimension_numbers<[1], [0], [0], [1], [0, 0, 1, 1], [], []>} : vector<16x32xbf16>, vector<32x64xbf16>, vector<16x64xf32> -> vector<16x64xf32>
    %145 = vector.broadcast %45 : vector<1x64xf32> to vector<16x64xf32>
    %146 = arith.addf %144, %145 : vector<16x64xf32>
    %cst_45 = arith.constant 5.000000e-01 : f32
    %147 = vector.broadcast %cst_45 : f32 to vector<16x64xf32>
    %148 = arith.mulf %147, %146 : vector<16x64xf32>
    %cst_46 = arith.constant 4.471500e-02 : f32
    %149 = vector.broadcast %cst_46 : f32 to vector<16x64xf32>
    %150 = arith.mulf %149, %146 : vector<16x64xf32>
    %151 = arith.mulf %150, %146 : vector<16x64xf32>
    %152 = arith.mulf %151, %146 : vector<16x64xf32>
    %153 = arith.addf %146, %152 : vector<16x64xf32>
    %cst_47 = arith.constant 0.797884583 : f32
    %154 = vector.broadcast %cst_47 : f32 to vector<16x64xf32>
    %155 = arith.mulf %154, %153 : vector<16x64xf32>
    %156 = math.tanh %155 : vector<16x64xf32>
    %cst_48 = arith.constant 1.000000e+00 : f32
    %157 = vector.broadcast %cst_48 : f32 to vector<16x64xf32>
    %158 = arith.addf %157, %156 : vector<16x64xf32>
    %159 = arith.mulf %148, %158 : vector<16x64xf32>
    %160 = arith.truncf %159 : vector<16x64xf32> to vector<16x64xbf16>
    %cst_49 = arith.constant dense<0.000000e+00> : vector<16x32xf32>
    %161 = tpu.matmul %160, %38, %cst_49 {dimension_numbers = #tpu.dot_dimension_numbers<[1], [0], [0], [1], [0, 0, 1, 1], [], []>} : vector<16x64xbf16>, vector<64x32xbf16>, vector<16x32xf32> -> vector<16x32xf32>
    %162 = vector.broadcast %46 : vector<1x32xf32> to vector<16x32xf32>
    %163 = arith.addf %161, %162 : vector<16x32xf32>
    %164 = arith.addf %142, %163 : vector<16x32xf32>
    %cst_50 = arith.constant dense<0.000000e+00> : vector<16xf32>
    %165 = vector.multi_reduction <add>, %164, %cst_50 [1] : vector<16x32xf32> to vector<16xf32>
    %166 = vector.shape_cast %165 : vector<16xf32> to vector<16x1xf32>
    %cst_51 = arith.constant 3.200000e+01 : f32
    %167 = vector.broadcast %cst_51 : f32 to vector<16x1xf32>
    %168 = arith.divf %166, %167 : vector<16x1xf32>
    %169 = vector.broadcast %168 : vector<16x1xf32> to vector<16x32xf32>
    %170 = arith.subf %164, %169 : vector<16x32xf32>
    %171 = vector.broadcast %168 : vector<16x1xf32> to vector<16x32xf32>
    %172 = arith.subf %164, %171 : vector<16x32xf32>
    %173 = arith.mulf %170, %172 : vector<16x32xf32>
    %cst_52 = arith.constant dense<0.000000e+00> : vector<16xf32>
    %174 = vector.multi_reduction <add>, %173, %cst_52 [1] : vector<16x32xf32> to vector<16xf32>
    %175 = vector.shape_cast %174 : vector<16xf32> to vector<16x1xf32>
    %cst_53 = arith.constant 3.200000e+01 : f32
    %176 = vector.broadcast %cst_53 : f32 to vector<16x1xf32>
    %177 = arith.divf %175, %176 : vector<16x1xf32>
    %178 = vector.broadcast %168 : vector<16x1xf32> to vector<16x32xf32>
    %179 = arith.subf %164, %178 : vector<16x32xf32>
    %cst_54 = arith.constant 9.99999996E-13 : f32
    %180 = vector.broadcast %cst_54 : f32 to vector<16x1xf32>
    %181 = arith.addf %177, %180 : vector<16x1xf32>
    %182 = math.rsqrt %181 : vector<16x1xf32>
    %183 = vector.broadcast %182 : vector<16x1xf32> to vector<16x32xf32>
    %184 = arith.mulf %179, %183 : vector<16x32xf32>
    %185 = vector.broadcast %47 : vector<1x32xf32> to vector<16x32xf32>
    %186 = arith.mulf %184, %185 : vector<16x32xf32>
    %187 = vector.broadcast %48 : vector<1x32xf32> to vector<16x32xf32>
    %188 = arith.addf %186, %187 : vector<16x32xf32>
    %c1 = arith.constant 1 : index
    %c0_55 = arith.constant 0 : index
    %c0_56 = arith.constant 0 : index
    %189 = vector.load %arg3[%c1, %c0_55, %c0_56] : memref<2x32x96xbf16, #tpu.memory_space<vmem>>, vector<1x32x96xbf16>
    %190 = vector.shape_cast %189 : vector<1x32x96xbf16> to vector<32x96xbf16>
    %c1_57 = arith.constant 1 : index
    %c0_58 = arith.constant 0 : index
    %c0_59 = arith.constant 0 : index
    %191 = vector.load %arg4[%c1_57, %c0_58, %c0_59] : memref<2x32x32xbf16, #tpu.memory_space<vmem>>, vector<1x32x32xbf16>
    %192 = vector.shape_cast %191 : vector<1x32x32xbf16> to vector<32x32xbf16>
    %c1_60 = arith.constant 1 : index
    %c0_61 = arith.constant 0 : index
    %c0_62 = arith.constant 0 : index
    %193 = vector.load %arg5[%c1_60, %c0_61, %c0_62] : memref<2x32x64xbf16, #tpu.memory_space<vmem>>, vector<1x32x64xbf16>
    %194 = vector.shape_cast %193 : vector<1x32x64xbf16> to vector<32x64xbf16>
    %c1_63 = arith.constant 1 : index
    %c0_64 = arith.constant 0 : index
    %c0_65 = arith.constant 0 : index
    %195 = vector.load %arg6[%c1_63, %c0_64, %c0_65] : memref<2x64x32xbf16, #tpu.memory_space<vmem>>, vector<1x64x32xbf16>
    %196 = vector.shape_cast %195 : vector<1x64x32xbf16> to vector<64x32xbf16>
    %c1_66 = arith.constant 1 : index
    %c0_67 = arith.constant 0 : index
    %c0_68 = arith.constant 0 : index
    %197 = vector.load %arg7[%c1_66, %c0_67, %c0_68] : memref<2x8x128xf32, #tpu.memory_space<vmem>>, vector<1x8x128xf32>
    %198 = vector.shape_cast %197 : vector<1x8x128xf32> to vector<8x128xf32>
    %199 = vector.extract_strided_slice %198 {offsets = [0, 0], sizes = [1, 96], strides = [1, 1]} : vector<8x128xf32> to vector<1x96xf32>
    %200 = vector.extract_strided_slice %198 {offsets = [1, 0], sizes = [1, 32], strides = [1, 1]} : vector<8x128xf32> to vector<1x32xf32>
    %201 = vector.extract_strided_slice %198 {offsets = [2, 0], sizes = [1, 32], strides = [1, 1]} : vector<8x128xf32> to vector<1x32xf32>
    %202 = vector.extract_strided_slice %198 {offsets = [3, 0], sizes = [1, 32], strides = [1, 1]} : vector<8x128xf32> to vector<1x32xf32>
    %203 = vector.extract_strided_slice %198 {offsets = [4, 0], sizes = [1, 64], strides = [1, 1]} : vector<8x128xf32> to vector<1x64xf32>
    %204 = vector.extract_strided_slice %198 {offsets = [5, 0], sizes = [1, 32], strides = [1, 1]} : vector<8x128xf32> to vector<1x32xf32>
    %205 = vector.extract_strided_slice %198 {offsets = [6, 0], sizes = [1, 32], strides = [1, 1]} : vector<8x128xf32> to vector<1x32xf32>
    %206 = vector.extract_strided_slice %198 {offsets = [7, 0], sizes = [1, 32], strides = [1, 1]} : vector<8x128xf32> to vector<1x32xf32>
    %207 = arith.truncf %188 : vector<16x32xf32> to vector<16x32xbf16>
    %cst_69 = arith.constant dense<0.000000e+00> : vector<16x96xf32>
    %208 = tpu.matmul %207, %190, %cst_69 {dimension_numbers = #tpu.dot_dimension_numbers<[1], [0], [0], [1], [0, 0, 1, 1], [], []>} : vector<16x32xbf16>, vector<32x96xbf16>, vector<16x96xf32> -> vector<16x96xf32>
    %209 = vector.broadcast %199 : vector<1x96xf32> to vector<16x96xf32>
    %210 = arith.addf %208, %209 : vector<16x96xf32>
    %cst_70 = arith.constant 0.000000e+00 : f32
    %211 = vector.broadcast %cst_70 : f32 to vector<16x32xf32>
    %212 = vector.extract_strided_slice %210 {offsets = [0, 0], sizes = [16, 16], strides = [1, 1]} : vector<16x96xf32> to vector<16x16xf32>
    %213 = vector.shape_cast %212 : vector<16x16xf32> to vector<2x8x16xf32>
    %214 = vector.extract_strided_slice %210 {offsets = [0, 32], sizes = [16, 16], strides = [1, 1]} : vector<16x96xf32> to vector<16x16xf32>
    %215 = vector.shape_cast %214 : vector<16x16xf32> to vector<2x8x16xf32>
    %216 = vector.extract_strided_slice %210 {offsets = [0, 64], sizes = [16, 16], strides = [1, 1]} : vector<16x96xf32> to vector<16x16xf32>
    %217 = vector.shape_cast %216 : vector<16x16xf32> to vector<2x8x16xf32>
    %218 = arith.truncf %213 : vector<2x8x16xf32> to vector<2x8x16xbf16>
    %219 = arith.truncf %215 : vector<2x8x16xf32> to vector<2x8x16xbf16>
    "tpu.trace_start"() <{level = 10 : i32, message = "bqd,bkd->bqk"}> : () -> ()
    %cst_71 = arith.constant dense<0.000000e+00> : vector<2x8x8xf32>
    %220 = tpu.matmul %218, %219, %cst_71 {dimension_numbers = #tpu.dot_dimension_numbers<[2], [2], [1], [1], [0, 0, 0, 1, 1, 1], [0], [0]>} : vector<2x8x16xbf16>, vector<2x8x16xbf16>, vector<2x8x8xf32> -> vector<2x8x8xf32>
    "tpu.trace_stop"() : () -> ()
    %cst_72 = arith.constant 2.500000e-01 : f32
    %221 = vector.broadcast %cst_72 : f32 to vector<2x8x8xf32>
    %222 = arith.mulf %220, %221 : vector<2x8x8xf32>
    %223 = vector.broadcast %5 : vector<2x1x8xf32> to vector<2x8x8xf32>
    %224 = arith.addf %222, %223 : vector<2x8x8xf32>
    %cst_73 = arith.constant dense<0xFF800000> : vector<2x8xf32>
    %225 = vector.multi_reduction <maximumf>, %224, %cst_73 [2] : vector<2x8x8xf32> to vector<2x8xf32>
    %226 = vector.shape_cast %225 : vector<2x8xf32> to vector<2x8x1xf32>
    %227 = vector.broadcast %226 : vector<2x8x1xf32> to vector<2x8x8xf32>
    %228 = arith.subf %224, %227 : vector<2x8x8xf32>
    %229 = math.exp %228 : vector<2x8x8xf32>
    %cst_74 = arith.constant dense<0.000000e+00> : vector<2x8xf32>
    %230 = vector.multi_reduction <add>, %229, %cst_74 [2] : vector<2x8x8xf32> to vector<2x8xf32>
    %231 = vector.shape_cast %230 : vector<2x8xf32> to vector<2x8x1xf32>
    %232 = tpu.reciprocal %231 {approx = true} : vector<2x8x1xf32> -> vector<2x8x1xf32>
    %233 = vector.broadcast %232 : vector<2x8x1xf32> to vector<2x8x8xf32>
    %234 = arith.mulf %229, %233 : vector<2x8x8xf32>
    %235 = arith.truncf %234 : vector<2x8x8xf32> to vector<2x8x8xbf16>
    %236 = arith.truncf %217 : vector<2x8x16xf32> to vector<2x8x16xbf16>
    "tpu.trace_start"() <{level = 10 : i32, message = "bqk,bkd->bqd"}> : () -> ()
    %cst_75 = arith.constant dense<0.000000e+00> : vector<2x8x16xf32>
    %237 = tpu.matmul %235, %236, %cst_75 {dimension_numbers = #tpu.dot_dimension_numbers<[2], [1], [1], [2], [0, 0, 0, 1, 1, 2], [0], [0]>} : vector<2x8x8xbf16>, vector<2x8x16xbf16>, vector<2x8x16xf32> -> vector<2x8x16xf32>
    "tpu.trace_stop"() : () -> ()
    %238 = vector.shape_cast %237 : vector<2x8x16xf32> to vector<16x16xf32>
    %239 = arith.truncf %238 : vector<16x16xf32> to vector<16x16xbf16>
    %240 = vector.extract_strided_slice %192 {offsets = [0, 0], sizes = [16, 32], strides = [1, 1]} : vector<32x32xbf16> to vector<16x32xbf16>
    %cst_76 = arith.constant dense<0.000000e+00> : vector<16x32xf32>
    %241 = tpu.matmul %239, %240, %cst_76 {dimension_numbers = #tpu.dot_dimension_numbers<[1], [0], [0], [1], [0, 0, 1, 1], [], []>} : vector<16x16xbf16>, vector<16x32xbf16>, vector<16x32xf32> -> vector<16x32xf32>
    %242 = arith.addf %211, %241 : vector<16x32xf32>
    %243 = vector.extract_strided_slice %210 {offsets = [0, 16], sizes = [16, 16], strides = [1, 1]} : vector<16x96xf32> to vector<16x16xf32>
    %244 = vector.shape_cast %243 : vector<16x16xf32> to vector<2x8x16xf32>
    %245 = vector.extract_strided_slice %210 {offsets = [0, 48], sizes = [16, 16], strides = [1, 1]} : vector<16x96xf32> to vector<16x16xf32>
    %246 = vector.shape_cast %245 : vector<16x16xf32> to vector<2x8x16xf32>
    %247 = vector.extract_strided_slice %210 {offsets = [0, 80], sizes = [16, 16], strides = [1, 1]} : vector<16x96xf32> to vector<16x16xf32>
    %248 = vector.shape_cast %247 : vector<16x16xf32> to vector<2x8x16xf32>
    %249 = arith.truncf %244 : vector<2x8x16xf32> to vector<2x8x16xbf16>
    %250 = arith.truncf %246 : vector<2x8x16xf32> to vector<2x8x16xbf16>
    "tpu.trace_start"() <{level = 10 : i32, message = "bqd,bkd->bqk"}> : () -> ()
    %cst_77 = arith.constant dense<0.000000e+00> : vector<2x8x8xf32>
    %251 = tpu.matmul %249, %250, %cst_77 {dimension_numbers = #tpu.dot_dimension_numbers<[2], [2], [1], [1], [0, 0, 0, 1, 1, 1], [0], [0]>} : vector<2x8x16xbf16>, vector<2x8x16xbf16>, vector<2x8x8xf32> -> vector<2x8x8xf32>
    "tpu.trace_stop"() : () -> ()
    %cst_78 = arith.constant 2.500000e-01 : f32
    %252 = vector.broadcast %cst_78 : f32 to vector<2x8x8xf32>
    %253 = arith.mulf %251, %252 : vector<2x8x8xf32>
    %254 = vector.broadcast %5 : vector<2x1x8xf32> to vector<2x8x8xf32>
    %255 = arith.addf %253, %254 : vector<2x8x8xf32>
    %cst_79 = arith.constant dense<0xFF800000> : vector<2x8xf32>
    %256 = vector.multi_reduction <maximumf>, %255, %cst_79 [2] : vector<2x8x8xf32> to vector<2x8xf32>
    %257 = vector.shape_cast %256 : vector<2x8xf32> to vector<2x8x1xf32>
    %258 = vector.broadcast %257 : vector<2x8x1xf32> to vector<2x8x8xf32>
    %259 = arith.subf %255, %258 : vector<2x8x8xf32>
    %260 = math.exp %259 : vector<2x8x8xf32>
    %cst_80 = arith.constant dense<0.000000e+00> : vector<2x8xf32>
    %261 = vector.multi_reduction <add>, %260, %cst_80 [2] : vector<2x8x8xf32> to vector<2x8xf32>
    %262 = vector.shape_cast %261 : vector<2x8xf32> to vector<2x8x1xf32>
    %263 = tpu.reciprocal %262 {approx = true} : vector<2x8x1xf32> -> vector<2x8x1xf32>
    %264 = vector.broadcast %263 : vector<2x8x1xf32> to vector<2x8x8xf32>
    %265 = arith.mulf %260, %264 : vector<2x8x8xf32>
    %266 = arith.truncf %265 : vector<2x8x8xf32> to vector<2x8x8xbf16>
    %267 = arith.truncf %248 : vector<2x8x16xf32> to vector<2x8x16xbf16>
    "tpu.trace_start"() <{level = 10 : i32, message = "bqk,bkd->bqd"}> : () -> ()
    %cst_81 = arith.constant dense<0.000000e+00> : vector<2x8x16xf32>
    %268 = tpu.matmul %266, %267, %cst_81 {dimension_numbers = #tpu.dot_dimension_numbers<[2], [1], [1], [2], [0, 0, 0, 1, 1, 2], [0], [0]>} : vector<2x8x8xbf16>, vector<2x8x16xbf16>, vector<2x8x16xf32> -> vector<2x8x16xf32>
    "tpu.trace_stop"() : () -> ()
    %269 = vector.shape_cast %268 : vector<2x8x16xf32> to vector<16x16xf32>
    %270 = arith.truncf %269 : vector<16x16xf32> to vector<16x16xbf16>
    %271 = vector.extract_strided_slice %192 {offsets = [16, 0], sizes = [16, 32], strides = [1, 1]} : vector<32x32xbf16> to vector<16x32xbf16>
    %cst_82 = arith.constant dense<0.000000e+00> : vector<16x32xf32>
    %272 = tpu.matmul %270, %271, %cst_82 {dimension_numbers = #tpu.dot_dimension_numbers<[1], [0], [0], [1], [0, 0, 1, 1], [], []>} : vector<16x16xbf16>, vector<16x32xbf16>, vector<16x32xf32> -> vector<16x32xf32>
    %273 = arith.addf %242, %272 : vector<16x32xf32>
    %274 = arith.addf %188, %273 : vector<16x32xf32>
    %275 = vector.broadcast %200 : vector<1x32xf32> to vector<16x32xf32>
    %276 = arith.addf %274, %275 : vector<16x32xf32>
    %cst_83 = arith.constant dense<0.000000e+00> : vector<16xf32>
    %277 = vector.multi_reduction <add>, %276, %cst_83 [1] : vector<16x32xf32> to vector<16xf32>
    %278 = vector.shape_cast %277 : vector<16xf32> to vector<16x1xf32>
    %cst_84 = arith.constant 3.200000e+01 : f32
    %279 = vector.broadcast %cst_84 : f32 to vector<16x1xf32>
    %280 = arith.divf %278, %279 : vector<16x1xf32>
    %281 = vector.broadcast %280 : vector<16x1xf32> to vector<16x32xf32>
    %282 = arith.subf %276, %281 : vector<16x32xf32>
    %283 = vector.broadcast %280 : vector<16x1xf32> to vector<16x32xf32>
    %284 = arith.subf %276, %283 : vector<16x32xf32>
    %285 = arith.mulf %282, %284 : vector<16x32xf32>
    %cst_85 = arith.constant dense<0.000000e+00> : vector<16xf32>
    %286 = vector.multi_reduction <add>, %285, %cst_85 [1] : vector<16x32xf32> to vector<16xf32>
    %287 = vector.shape_cast %286 : vector<16xf32> to vector<16x1xf32>
    %cst_86 = arith.constant 3.200000e+01 : f32
    %288 = vector.broadcast %cst_86 : f32 to vector<16x1xf32>
    %289 = arith.divf %287, %288 : vector<16x1xf32>
    %290 = vector.broadcast %280 : vector<16x1xf32> to vector<16x32xf32>
    %291 = arith.subf %276, %290 : vector<16x32xf32>
    %cst_87 = arith.constant 9.99999996E-13 : f32
    %292 = vector.broadcast %cst_87 : f32 to vector<16x1xf32>
    %293 = arith.addf %289, %292 : vector<16x1xf32>
    %294 = math.rsqrt %293 : vector<16x1xf32>
    %295 = vector.broadcast %294 : vector<16x1xf32> to vector<16x32xf32>
    %296 = arith.mulf %291, %295 : vector<16x32xf32>
    %297 = vector.broadcast %201 : vector<1x32xf32> to vector<16x32xf32>
    %298 = arith.mulf %296, %297 : vector<16x32xf32>
    %299 = vector.broadcast %202 : vector<1x32xf32> to vector<16x32xf32>
    %300 = arith.addf %298, %299 : vector<16x32xf32>
    %301 = arith.truncf %300 : vector<16x32xf32> to vector<16x32xbf16>
    %cst_88 = arith.constant dense<0.000000e+00> : vector<16x64xf32>
    %302 = tpu.matmul %301, %194, %cst_88 {dimension_numbers = #tpu.dot_dimension_numbers<[1], [0], [0], [1], [0, 0, 1, 1], [], []>} : vector<16x32xbf16>, vector<32x64xbf16>, vector<16x64xf32> -> vector<16x64xf32>
    %303 = vector.broadcast %203 : vector<1x64xf32> to vector<16x64xf32>
    %304 = arith.addf %302, %303 : vector<16x64xf32>
    %cst_89 = arith.constant 5.000000e-01 : f32
    %305 = vector.broadcast %cst_89 : f32 to vector<16x64xf32>
    %306 = arith.mulf %305, %304 : vector<16x64xf32>
    %cst_90 = arith.constant 4.471500e-02 : f32
    %307 = vector.broadcast %cst_90 : f32 to vector<16x64xf32>
    %308 = arith.mulf %307, %304 : vector<16x64xf32>
    %309 = arith.mulf %308, %304 : vector<16x64xf32>
    %310 = arith.mulf %309, %304 : vector<16x64xf32>
    %311 = arith.addf %304, %310 : vector<16x64xf32>
    %cst_91 = arith.constant 0.797884583 : f32
    %312 = vector.broadcast %cst_91 : f32 to vector<16x64xf32>
    %313 = arith.mulf %312, %311 : vector<16x64xf32>
    %314 = math.tanh %313 : vector<16x64xf32>
    %cst_92 = arith.constant 1.000000e+00 : f32
    %315 = vector.broadcast %cst_92 : f32 to vector<16x64xf32>
    %316 = arith.addf %315, %314 : vector<16x64xf32>
    %317 = arith.mulf %306, %316 : vector<16x64xf32>
    %318 = arith.truncf %317 : vector<16x64xf32> to vector<16x64xbf16>
    %cst_93 = arith.constant dense<0.000000e+00> : vector<16x32xf32>
    %319 = tpu.matmul %318, %196, %cst_93 {dimension_numbers = #tpu.dot_dimension_numbers<[1], [0], [0], [1], [0, 0, 1, 1], [], []>} : vector<16x64xbf16>, vector<64x32xbf16>, vector<16x32xf32> -> vector<16x32xf32>
    %320 = vector.broadcast %204 : vector<1x32xf32> to vector<16x32xf32>
    %321 = arith.addf %319, %320 : vector<16x32xf32>
    %322 = arith.addf %300, %321 : vector<16x32xf32>
    %cst_94 = arith.constant dense<0.000000e+00> : vector<16xf32>
    %323 = vector.multi_reduction <add>, %322, %cst_94 [1] : vector<16x32xf32> to vector<16xf32>
    %324 = vector.shape_cast %323 : vector<16xf32> to vector<16x1xf32>
    %cst_95 = arith.constant 3.200000e+01 : f32
    %325 = vector.broadcast %cst_95 : f32 to vector<16x1xf32>
    %326 = arith.divf %324, %325 : vector<16x1xf32>
    %327 = vector.broadcast %326 : vector<16x1xf32> to vector<16x32xf32>
    %328 = arith.subf %322, %327 : vector<16x32xf32>
    %329 = vector.broadcast %326 : vector<16x1xf32> to vector<16x32xf32>
    %330 = arith.subf %322, %329 : vector<16x32xf32>
    %331 = arith.mulf %328, %330 : vector<16x32xf32>
    %cst_96 = arith.constant dense<0.000000e+00> : vector<16xf32>
    %332 = vector.multi_reduction <add>, %331, %cst_96 [1] : vector<16x32xf32> to vector<16xf32>
    %333 = vector.shape_cast %332 : vector<16xf32> to vector<16x1xf32>
    %cst_97 = arith.constant 3.200000e+01 : f32
    %334 = vector.broadcast %cst_97 : f32 to vector<16x1xf32>
    %335 = arith.divf %333, %334 : vector<16x1xf32>
    %336 = vector.broadcast %326 : vector<16x1xf32> to vector<16x32xf32>
    %337 = arith.subf %322, %336 : vector<16x32xf32>
    %cst_98 = arith.constant 9.99999996E-13 : f32
    %338 = vector.broadcast %cst_98 : f32 to vector<16x1xf32>
    %339 = arith.addf %335, %338 : vector<16x1xf32>
    %340 = math.rsqrt %339 : vector<16x1xf32>
    %341 = vector.broadcast %340 : vector<16x1xf32> to vector<16x32xf32>
    %342 = arith.mulf %337, %341 : vector<16x32xf32>
    %343 = vector.broadcast %205 : vector<1x32xf32> to vector<16x32xf32>
    %344 = arith.mulf %342, %343 : vector<16x32xf32>
    %345 = vector.broadcast %206 : vector<1x32xf32> to vector<16x32xf32>
    %346 = arith.addf %344, %345 : vector<16x32xf32>
    %347 = arith.truncf %346 : vector<16x32xf32> to vector<16x32xbf16>
    %c0_99 = arith.constant 0 : index
    %c0_100 = arith.constant 0 : index
    %348 = vector.load %arg8[%c0_99, %c0_100] : memref<32x32xbf16, #tpu.memory_space<vmem>>, vector<32x32xbf16>
    %cst_101 = arith.constant dense<0.000000e+00> : vector<16x32xf32>
    %349 = tpu.matmul %347, %348, %cst_101 {dimension_numbers = #tpu.dot_dimension_numbers<[1], [0], [0], [1], [0, 0, 1, 1], [], []>} : vector<16x32xbf16>, vector<32x32xbf16>, vector<16x32xf32> -> vector<16x32xf32>
    %350 = vector.broadcast %3 : vector<1x32xf32> to vector<16x32xf32>
    %351 = arith.addf %349, %350 : vector<16x32xf32>
    %352 = math.tanh %351 : vector<16x32xf32>
    %353 = arith.truncf %352 : vector<16x32xf32> to vector<16x32xbf16>
    %c0_102 = arith.constant 0 : index
    %c0_103 = arith.constant 0 : index
    %354 = vector.load %arg9[%c0_102, %c0_103] : memref<32x128xbf16, #tpu.memory_space<vmem>>, vector<32x128xbf16>
    %cst_104 = arith.constant dense<0.000000e+00> : vector<16x128xf32>
    %355 = tpu.matmul %353, %354, %cst_104 {dimension_numbers = #tpu.dot_dimension_numbers<[1], [0], [0], [1], [0, 0, 1, 1], [], []>} : vector<16x32xbf16>, vector<32x128xbf16>, vector<16x128xf32> -> vector<16x128xf32>
    %356 = vector.broadcast %4 : vector<1x128xf32> to vector<16x128xf32>
    %357 = arith.addf %355, %356 : vector<16x128xf32>
    %c0_105 = arith.constant 0 : index
    %c0_106 = arith.constant 0 : index
    %358 = vector.load %arg10[%c0_105, %c0_106] : memref<16x128xf32, #tpu.memory_space<vmem>>, vector<16x128xf32>
    tpu.vector_store %arg10[%c0_105, %c0_106], %357 {strides = array<i32>} : memref<16x128xf32, #tpu.memory_space<vmem>>, vector<16x128xf32>,
    return
  }
}

</mosaic_0001>

<llo_original>
// kernel: tpu_custom_call.1
$region0: #{tpu_custom_call.1}
  #allocation0 [shape = 'u32[]', space=smem, size = 0x4, offset = 0x4, fixed_abs, tag = 'smem constant byte address 0x4 - core index']
  #allocation1 [shape = 'u32[72,128]{1,0:T(1,128)}', space=vmem, size = 0x9000, scoped, tag = 'internal scratch']
  %s0 = inlined_call_operand.hbm [shape: f32[16,32], index: 0, kind: input, shape index: {}]
  %s1 = inlined_call_operand.hbm [shape: f32[2,1,8], index: 1, kind: input, shape index: {}]
  %s2 = inlined_call_operand.hbm [shape: f32[8,128], index: 2, kind: input, shape index: {}]
  %s3 = inlined_call_operand.vmem [shape: bf16[2,32,96], index: 3, kind: input, shape index: {}]
  %s4 = inlined_call_operand.vmem [shape: bf16[2,32,32], index: 4, kind: input, shape index: {}]
  %s5 = inlined_call_operand.vmem [shape: bf16[2,32,64], index: 5, kind: input, shape index: {}]
  %s6 = inlined_call_operand.vmem [shape: bf16[2,64,32], index: 6, kind: input, shape index: {}]
  %s7 = inlined_call_operand.hbm [shape: f32[2,8,128], index: 7, kind: input, shape index: {}]
  %s8 = inlined_call_operand.hbm [shape: bf16[32,32], index: 8, kind: input, shape index: {}]
  %s9 = inlined_call_operand.hbm [shape: bf16[32,128], index: 9, kind: input, shape index: {}]
  %s10 = inlined_call_operand.hbm [shape: f32[16,128], index: 10, kind: output, shape index: {}]
  %s11 = sld [smem:[#allocation0]]
  $region74: #{tpu_custom_call.1} parent=0
    _
  %s13 = ssub.s32 1, %s11
  %s14 = scalar_select 0, %s13, %s11
  $region1: #{tpu_custom_call.1} parent=0
    #allocation2 [shape = 'u8[8192]{0}', space=vmem, size = 0x2000, scoped, tag = 'input window, operand 0, single buffered']
    #allocation3 [shape = 's32[1]{0}', space=sflag, size = 0x4, scoped, tag = 'scoped memory for tpu_custom_call.1']
    #allocation4 [shape = 's32[1]{0}', space=sflag, size = 0x4, scoped, tag = 'scoped memory for tpu_custom_call.1']
    #allocation5 [shape = 'u8[1024]{0}', space=vmem, size = 0x400, scoped, tag = 'input window, operand 1, single buffered']
    #allocation6 [shape = 's32[1]{0}', space=sflag, size = 0x4, scoped, tag = 'scoped memory for tpu_custom_call.1']
    #allocation7 [shape = 'u8[4096]{0}', space=vmem, size = 0x1000, scoped, tag = 'input window, operand 2, single buffered']
    #allocation8 [shape = 'u8[8192]{0}', space=vmem, size = 0x2000, scoped, tag = 'input window, operand 7, single buffered']
    #allocation9 [shape = 's32[1]{0}', space=sflag, size = 0x4, scoped, tag = 'scoped memory for tpu_custom_call.1']
    #allocation10 [shape = 'u8[8192]{0}', space=vmem, size = 0x2000, scoped, tag = 'input window, operand 8, single buffered']
    #allocation11 [shape = 'u8[8192]{0}', space=vmem, size = 0x2000, scoped, tag = 'input window, operand 9, single buffered']
    #allocation12 [shape = 's32[1]{0}', space=sflag, size = 0x4, scoped, tag = 'scoped memory for tpu_custom_call.1']
    #allocation13 [shape = 'u8[8192]{0}', space=vmem, size = 0x2000, scoped, tag = 'output window, operand 0, single buffered']
    %15 = vsyncpa [#allocation3], 0
    %16 = vsyncpa [#allocation6], 0
    %17 = vsyncpa [#allocation9], 0
    %18 = vsyncpa [#allocation12], 0
    %19 = vsyncpa [#allocation4], 0
    // Predicated region
    $region2: #{tpu_custom_call.1} parent=1 // pred_check
      _
    $region3: #{tpu_custom_call.1} parent=1 // pred_check_branch
      %21 = sbr.rel (0) target = $region5
    $region4: #{tpu_custom_call.1} parent=1 // pred_region
      %23 = vsyncadd [#allocation3], 0
      %s24 = sshll.u32 %s0, 4
      %s25 = int_to_ptr.hbm [resolvable:$true] %s24
      %s26 = sshll.u32 [#allocation2], 4
      %s27 = int_to_ptr.vmem [resolvable:$true] %s26
      %32 = dma.hbm_to_vmem [thread:$0]  %s25, 256, %s27, [#allocation3], 128, 128, 8
    $region5: #{tpu_custom_call.1} parent=1 // pred_fallthru
      _
    // Predicated region
    $region6: #{tpu_custom_call.1} parent=1 // pred_check
      _
    $region7: #{tpu_custom_call.1} parent=1 // pred_check_branch
      %34 = sbr.rel (0) target = $region9
    $region8: #{tpu_custom_call.1} parent=1 // pred_region
      %36 = vsyncadd [#allocation6], 0
      %s37 = sshll.u32 %s1, 4
      %s38 = int_to_ptr.hbm [resolvable:$true] %s37
      %s39 = sshll.u32 [#allocation5], 4
      %s40 = int_to_ptr.vmem [resolvable:$true] %s39
      %45 = dma.hbm_to_vmem [thread:$0]  %s38, 32, %s40, [#allocation6], 16, 16, 1
    $region9: #{tpu_custom_call.1} parent=1 // pred_fallthru
      _
    // Predicated region
    $region10: #{tpu_custom_call.1} parent=1 // pred_check
      _
    $region11: #{tpu_custom_call.1} parent=1 // pred_check_branch
      %47 = sbr.rel (0) target = $region13
    $region12: #{tpu_custom_call.1} parent=1 // pred_region
      %49 = vsyncadd [#allocation6], 0
      %s51 = sshll.u32 %s2, 4
      %s52 = int_to_ptr.hbm [resolvable:$true] %s51
      %s53 = sshll.u32 [#allocation7], 4
      %s54 = int_to_ptr.vmem [resolvable:$true] %s53
      %56 = dma.hbm_to_vmem [thread:$0]  %s52, 128, %s54, [#allocation6]
    $region13: #{tpu_custom_call.1} parent=1 // pred_fallthru
      _
    // Predicated region
    $region14: #{tpu_custom_call.1} parent=1 // pred_check
      _
    $region15: #{tpu_custom_call.1} parent=1 // pred_check_branch
      %58 = sbr.rel (0) target = $region17
    $region16: #{tpu_custom_call.1} parent=1 // pred_region
      _
    $region17: #{tpu_custom_call.1} parent=1 // pred_fallthru
      _
    // Predicated region
    $region18: #{tpu_custom_call.1} parent=1 // pred_check
      _
    $region19: #{tpu_custom_call.1} parent=1 // pred_check_branch
      %60 = sbr.rel (0) target = $region21
    $region20: #{tpu_custom_call.1} parent=1 // pred_region
      _
    $region21: #{tpu_custom_call.1} parent=1 // pred_fallthru
      _
    // Predicated region
    $region22: #{tpu_custom_call.1} parent=1 // pred_check
      _
    $region23: #{tpu_custom_call.1} parent=1 // pred_check_branch
      %62 = sbr.rel (0) target = $region25
    $region24: #{tpu_custom_call.1} parent=1 // pred_region
      _
    $region25: #{tpu_custom_call.1} parent=1 // pred_fallthru
      _
    // Predicated region
    $region26: #{tpu_custom_call.1} parent=1 // pred_check
      _
    $region27: #{tpu_custom_call.1} parent=1 // pred_check_branch
      %64 = sbr.rel (0) target = $region29
    $region28: #{tpu_custom_call.1} parent=1 // pred_region
      _
    $region29: #{tpu_custom_call.1} parent=1 // pred_fallthru
      _
    // Predicated region
    $region30: #{tpu_custom_call.1} parent=1 // pred_check
      _
    $region31: #{tpu_custom_call.1} parent=1 // pred_check_branch
      %66 = sbr.rel (0) target = $region33
    $region32: #{tpu_custom_call.1} parent=1 // pred_region
      %68 = vsyncadd [#allocation9], 0
      %s69 = sshll.u32 %s7, 4
      %s70 = int_to_ptr.hbm [resolvable:$true] %s69
      %s71 = sshll.u32 [#allocation8], 4
      %s72 = int_to_ptr.vmem [resolvable:$true] %s71
      %77 = dma.hbm_to_vmem [thread:$0]  %s70, 256, %s72, [#allocation9], 128, 128, 8
    $region33: #{tpu_custom_call.1} parent=1 // pred_fallthru
      _
    // Predicated region
    $region34: #{tpu_custom_call.1} parent=1 // pred_check
      _
    $region35: #{tpu_custom_call.1} parent=1 // pred_check_branch
      %79 = sbr.rel (0) target = $region37
    $region36: #{tpu_custom_call.1} parent=1 // pred_region
      %81 = vsyncadd [#allocation9], 0
      %s82 = sshll.u32 %s8, 4
      %s83 = int_to_ptr.hbm [resolvable:$true] %s82
      %s84 = sshll.u32 [#allocation10], 4
      %s85 = int_to_ptr.vmem [resolvable:$true] %s84
      %90 = dma.hbm_to_vmem [thread:$0]  %s83, 256, %s85, [#allocation9], 64, 64, 4
    $region37: #{tpu_custom_call.1} parent=1 // pred_fallthru
      _
    // Predicated region
    $region38: #{tpu_custom_call.1} parent=1 // pred_check
      _
    $region39: #{tpu_custom_call.1} parent=1 // pred_check_branch
      %92 = sbr.rel (0) target = $region41
    $region40: #{tpu_custom_call.1} parent=1 // pred_region
      %94 = vsyncadd [#allocation12], 0
      %s95 = sshll.u32 %s9, 4
      %s96 = int_to_ptr.hbm [resolvable:$true] %s95
      %s97 = sshll.u32 [#allocation11], 4
      %s98 = int_to_ptr.vmem [resolvable:$true] %s97
      %103 = dma.hbm_to_vmem [thread:$0]  %s96, 256, %s98, [#allocation12], 64, 64, 4
    $region41: #{tpu_custom_call.1} parent=1 // pred_fallthru
      _
    // Predicated region
    $region42: #{tpu_custom_call.1} parent=1 // pred_check
      _
    $region43: #{tpu_custom_call.1} parent=1 // pred_check_branch
      %105 = sbr.rel (0) target = $region45
    $region44: #{tpu_custom_call.1} parent=1 // pred_region
      %107 = dma.done [#allocation3], 256
    $region45: #{tpu_custom_call.1} parent=1 // pred_fallthru
      _
    // Predicated region
    $region46: #{tpu_custom_call.1} parent=1 // pred_check
      _
    $region47: #{tpu_custom_call.1} parent=1 // pred_check_branch
      %109 = sbr.rel (0) target = $region49
    $region48: #{tpu_custom_call.1} parent=1 // pred_region
      %111 = dma.done [#allocation6], 32
    $region49: #{tpu_custom_call.1} parent=1 // pred_fallthru
      _
    // Predicated region
    $region50: #{tpu_custom_call.1} parent=1 // pred_check
      _
    $region51: #{tpu_custom_call.1} parent=1 // pred_check_branch
      %113 = sbr.rel (0) target = $region53
    $region52: #{tpu_custom_call.1} parent=1 // pred_region
      %115 = dma.done [#allocation6], 128
    $region53: #{tpu_custom_call.1} parent=1 // pred_fallthru
      _
    // Predicated region
    $region54: #{tpu_custom_call.1} parent=1 // pred_check
      _
    $region55: #{tpu_custom_call.1} parent=1 // pred_check_branch
      %117 = sbr.rel (0) target = $region57
    $region56: #{tpu_custom_call.1} parent=1 // pred_region
      %119 = dma.done [#allocation9], 256
    $region57: #{tpu_custom_call.1} parent=1 // pred_fallthru
      _
    // Predicated region
    $region58: #{tpu_custom_call.1} parent=1 // pred_check
      _
    $region59: #{tpu_custom_call.1} parent=1 // pred_check_branch
      %121 = sbr.rel (0) target = $region61
    $region60: #{tpu_custom_call.1} parent=1 // pred_region
      %123 = dma.done [#allocation9], 256
    $region61: #{tpu_custom_call.1} parent=1 // pred_fallthru
      _
    // Predicated region
    $region62: #{tpu_custom_call.1} parent=1 // pred_check
      _
    $region63: #{tpu_custom_call.1} parent=1 // pred_check_branch
      %125 = sbr.rel (0) target = $region65
    $region64: #{tpu_custom_call.1} parent=1 // pred_region
      %127 = dma.done [#allocation12], 256
    $region65: #{tpu_custom_call.1} parent=1 // pred_fallthru
      _
    %v129 = vld [vmem:[#allocation7] sm:$0xff]
    %v130 = vld [vmem:[#allocation5] sm:$0x1]
    %v131 = vld [vmem:[#allocation5 + $0x1] sm:$0x1]
    %v132 = vld [vmem:[#allocation2] sm:$0xff]
    %v133 = vld [vmem:[#allocation2 + $0x8] sm:$0xff]
    %vm134 = vcmask 261120
    %v135 = vsel %vm134, %v132, 0.0
    %136 = vadd.xlane.f32.xlu0 %v135
    %v137 = vpop.xlane.xlu0 %136
    %v138 = vsel %vm134, %v133, 0.0
    %139 = vadd.xlane.f32.xlu0 %v138
    %v140 = vpop.xlane.xlu0 %139
    %v141 = vrcp.pop 32.0
    %v142 = vmul.f32 32.0, %v141
    %v143 = vsub.f32 1.0, %v142
    %v144 = vmul.f32 %v141, %v143
    %v145 = vadd.f32 %v141, %v144
    %vm146 = vweird.f32 %v141
    %v147 = vsel %vm146, %v141, %v145
    %v148 = vmul.f32 %v137, %v147
    %v149 = vmul.f32 %v140, %v147
    %v150 = vsub.f32 %v132, %v148
    %v151 = vsub.f32 %v133, %v149
    %v152 = vmul.f32 %v150, %v150
    %v153 = vmul.f32 %v151, %v151
    %v154 = vsel %vm134, %v152, 0.0
    %155 = vadd.xlane.f32.xlu0 %v154
    %v156 = vpop.xlane.xlu0 %155
    %v157 = vsel %vm134, %v153, 0.0
    %158 = vadd.xlane.f32.xlu0 %v157
    %v159 = vpop.xlane.xlu0 %158
    %v160 = vmul.f32 %v156, %v147
    %v161 = vmul.f32 %v159, %v147
    %v162 = vadd.f32 %v160, 1e-12
    %v163 = vadd.f32 %v161, 1e-12
    %v164 = vrsqrt.pop %v162
    %v165 = vmul.f32 %v164, %v162
    %v166 = vmul.f32 %v165, %v164
    %v167 = vmul.f32 0.5, %v166
    %v168 = vsub.f32 1.5, %v167
    %v169 = vmul.f32 %v164, %v168
    %vm170 = vweird.f32 %v162
    %vm171 = vweird.f32 %v164
    %vm172 = vmor %vm170, %vm171
    %v173 = vsel %vm172, %v164, %v169
    %v174 = vrsqrt.pop %v163
    %v175 = vmul.f32 %v174, %v163
    %v176 = vmul.f32 %v175, %v174
    %v177 = vmul.f32 0.5, %v176
    %v178 = vsub.f32 1.5, %v177
    %v179 = vmul.f32 %v174, %v178
    %vm180 = vweird.f32 %v163
    %vm181 = vweird.f32 %v174
    %vm182 = vmor %vm180, %vm181
    %v183 = vsel %vm182, %v174, %v179
    %v184 = vmul.f32 %v150, %v173
    %v185 = vmul.f32 %v151, %v183
    %v186 = vperm.slane %v129, 0
    %v187 = vmul.f32 %v184, %v186
    %v188 = vmul.f32 %v185, %v186
    %v189 = vperm.slane %v129, 1
    %v190 = vadd.f32 %v187, %v189
    %v191 = vadd.f32 %v188, %v189
    %v192 = vld [vmem:[%s3] sm:$0xf]
    %v193 = vld [vmem:[%s3 + $0x4] sm:$0xf]
    %v194 = vld [vmem:[%s3 + $0x8] sm:$0xf]
    %v195 = vld [vmem:[%s3 + $0xc] sm:$0xf]
    %v196 = vld [vmem:[%s4] sm:$0xf]
    %v197 = vld [vmem:[%s4 + $0x4] sm:$0xf]
    %v198 = vld [vmem:[%s4 + $0x8] sm:$0xf]
    %v199 = vld [vmem:[%s4 + $0xc] sm:$0xf]
    %v200 = vld [vmem:[%s5] sm:$0xf]
    %v201 = vld [vmem:[%s5 + $0x4] sm:$0xf]
    %v202 = vld [vmem:[%s5 + $0x8] sm:$0xf]
    %v203 = vld [vmem:[%s5 + $0xc] sm:$0xf]
    %v204 = vld [vmem:[%s6] sm:$0xf]
    %v205 = vld [vmem:[%s6 + $0x4] sm:$0xf]
    %v206 = vld [vmem:[%s6 + $0x8] sm:$0xf]
    %v207 = vld [vmem:[%s6 + $0xc] sm:$0xf]
    %v208 = vld [vmem:[%s6 + $0x10] sm:$0xf]
    %v209 = vld [vmem:[%s6 + $0x14] sm:$0xf]
    %v210 = vld [vmem:[%s6 + $0x18] sm:$0xf]
    %v211 = vld [vmem:[%s6 + $0x1c] sm:$0xf]
    %v212 = vld [vmem:[#allocation8] sm:$0xff]
    %v213 = vpack.c.bf16 %v191, %v190
    %v214 = vperm.slane %v212, 0
    %v219 = vunpack.c.l.b16 %v192
    %v220 = vunpack.c.l.b16 %v193
    %v221 = vunpack.c.l.b16 %v194
    %v222 = vunpack.c.l.b16 %v195
    %v223 = vpack.c.b16 %v220, %v219
    %v224 = vpack.c.b16 %v222, %v221
    %v228 = vsel %vm134, %v213, 0
    %230 = vmatpush.bf16.msra.mxu0 0
    %231 = vmatpush.bf16.msra.mxu0 0
    %232 = vmatpush.bf16.msra.mxu0 0
    %233 = vmatpush.bf16.msra.mxu0 0
    %234 = vmatpush.bf16.msra.mxu0 0
    %235 = vmatpush.bf16.msra.mxu0 0
    %236 = vmatpush.bf16.msra.mxu0 %v224
    %237 = vmatpush.bf16.msra.mxu0 %v223
    %238 = vmatmul.bf16.gmra.mxu0 %v228
    %v239 = vpop.f32.mrf.mxu0
    %v240 = vadd.f32 %v214, %v239
    %v241 = vpop.f32.mrf.mxu0
    %v242 = vadd.f32 %v214, %v241
    %243 = vdwg.mxu0
    %v244 = vpack.c.bf16 %v240, %v240
    %v245 = vpack.c.bf16 %v242, %v242
    %v247 = vunpack.c.l.b16 %v244
    %v248 = vpack.c.b16 %v247, %v247
    %249 = vrot.lane.b32.xlu0 %v248, 96
    %v250 = vpop.permute.xlu0 %249
    %vm251 = vcmask 130048
    %v253 = vsel %vm251, %v244, 0
    %v256 = vsel %vm251, %v250, 0
    %258 = vmatpush.bf16.xpose.msra.mxu0 0
    %259 = vmatpush.bf16.xpose.msra.mxu0 0
    %260 = vmatpush.bf16.xpose.msra.mxu0 0
    %261 = vmatpush.bf16.xpose.msra.mxu0 0
    %262 = vmatpush.bf16.xpose.msra.mxu0 0
    %263 = vmatpush.bf16.xpose.msra.mxu0 0
    %264 = vmatpush.bf16.xpose.msra.mxu0 0
    %265 = vmatpush.bf16.xpose.msra.mxu0 %v256
    %266 = vmatmul.bf16.gmra.mxu0 %v253
    %v267 = vpop.f32.mrf.mxu0
    %v268 = vadd.f32 0.0, %v267
    %v269 = vpop.f32.mrf.mxu0
    %270 = vdwg.mxu0
    %v272 = vunpack.c.l.b16 %v245
    %v273 = vpack.c.b16 %v272, %v272
    %274 = vrot.lane.b32.xlu0 %v273, 96
    %v275 = vpop.permute.xlu0 %274
    %v277 = vsel %vm251, %v245, 0
    %v280 = vsel %vm251, %v275, 0
    %282 = vmatpush.bf16.xpose.msra.mxu0 0
    %283 = vmatpush.bf16.xpose.msra.mxu0 0
    %284 = vmatpush.bf16.xpose.msra.mxu0 0
    %285 = vmatpush.bf16.xpose.msra.mxu0 0
    %286 = vmatpush.bf16.xpose.msra.mxu0 0
    %287 = vmatpush.bf16.xpose.msra.mxu0 0
    %288 = vmatpush.bf16.xpose.msra.mxu0 0
    %289 = vmatpush.bf16.xpose.msra.mxu0 %v280
    %290 = vmatmul.bf16.gmra.mxu0 %v277
    %v291 = vpop.f32.mrf.mxu0
    %v292 = vadd.f32 0.0, %v291
    %v293 = vpop.f32.mrf.mxu0
    %294 = vdwg.mxu0
    %v295 = vmul.f32 %v268, 0.25
    %v296 = vmul.f32 %v292, 0.25
    %v299 = vperm.slane %v130, 0
    %v300 = vperm.slane %v131, 0
    %v303 = vadd.f32 %v295, %v299
    %v304 = vadd.f32 %v296, %v300
    %vm305 = vcmask 64512
    %v306 = vsel %vm305, %v303, -inf
    %307 = vmax.xlane.f32.xlu0 %v306
    %v308 = vpop.xlane.xlu0 %307
    %v309 = vsel %vm305, %v304, -inf
    %310 = vmax.xlane.f32.xlu0 %v309
    %v311 = vpop.xlane.xlu0 %310
    %v312 = vsub.f32 %v303, %v308
    %v313 = vsub.f32 %v304, %v311
    %v314 = vmul.f32 %v312, 1.442695
    %v315 = vpow.pop %v314
    %v316 = vmul.f32 %v313, 1.442695
    %v317 = vpow.pop %v316
    %v318 = vsel %vm305, %v315, 0.0
    %319 = vadd.xlane.f32.xlu0 %v318
    %v320 = vpop.xlane.xlu0 %319
    %v321 = vsel %vm305, %v317, 0.0
    %322 = vadd.xlane.f32.xlu0 %v321
    %v323 = vpop.xlane.xlu0 %322
    %v324 = vrcp.pop %v320
    %v325 = vrcp.pop %v323
    %v326 = vmul.f32 %v315, %v324
    %v327 = vmul.f32 %v317, %v325
    %v328 = vpack.c.bf16 %v326, %v326
    %v329 = vpack.c.bf16 %v327, %v327
    %330 = vrot.lane.b32.xlu0 %v248, 64
    %v331 = vpop.permute.xlu0 %330
    %v333 = vsel %vm305, %v328, 0
    %vm335 = vcmask 1043456
    %v337 = vsel %vm335, %v331, 0
    %339 = vmatpush.bf16.msra.mxu0 0
    %340 = vmatpush.bf16.msra.mxu0 0
    %341 = vmatpush.bf16.msra.mxu0 0
    %342 = vmatpush.bf16.msra.mxu0 0
    %343 = vmatpush.bf16.msra.mxu0 0
    %344 = vmatpush.bf16.msra.mxu0 0
    %345 = vmatpush.bf16.msra.mxu0 0
    %346 = vmatpush.bf16.msra.mxu0 %v337
    %347 = vmatmul.bf16.gmra.mxu0 %v333
    %v348 = vpop.f32.mrf.mxu0
    %v349 = vadd.f32 0.0, %v348
    %v350 = vpop.f32.mrf.mxu0
    %351 = vdwg.mxu0
    %352 = vrot.lane.b32.xlu0 %v273, 64
    %v353 = vpop.permute.xlu0 %352
    %v355 = vsel %vm305, %v329, 0
    %v358 = vsel %vm335, %v353, 0
    %360 = vmatpush.bf16.msra.mxu0 0
    %361 = vmatpush.bf16.msra.mxu0 0
    %362 = vmatpush.bf16.msra.mxu0 0
    %363 = vmatpush.bf16.msra.mxu0 0
    %364 = vmatpush.bf16.msra.mxu0 0
    %365 = vmatpush.bf16.msra.mxu0 0
    %366 = vmatpush.bf16.msra.mxu0 0
    %367 = vmatpush.bf16.msra.mxu0 %v358
    %368 = vmatmul.bf16.gmra.mxu0 %v355
    %v369 = vpop.f32.mrf.mxu0
    %v370 = vadd.f32 0.0, %v369
    %v371 = vpop.f32.mrf.mxu0
    %372 = vdwg.mxu0
    %v373 = vpack.c.bf16 %v370, %v349
    %374 = vrot.lane.b32.xlu0 %v248, 112
    %v375 = vpop.permute.xlu0 %374
    %376 = vrot.lane.b32.xlu0 %v248, 80
    %v377 = vpop.permute.xlu0 %376
    %v379 = vsel %vm251, %v375, 0
    %v382 = vsel %vm251, %v377, 0
    %384 = vmatpush.bf16.xpose.msra.mxu0 0
    %385 = vmatpush.bf16.xpose.msra.mxu0 0
    %386 = vmatpush.bf16.xpose.msra.mxu0 0
    %387 = vmatpush.bf16.xpose.msra.mxu0 0
    %388 = vmatpush.bf16.xpose.msra.mxu0 0
    %389 = vmatpush.bf16.xpose.msra.mxu0 0
    %390 = vmatpush.bf16.xpose.msra.mxu0 0
    %391 = vmatpush.bf16.xpose.msra.mxu0 %v382
    %392 = vmatmul.bf16.gmra.mxu0 %v379
    %v393 = vpop.f32.mrf.mxu0
    %v394 = vadd.f32 0.0, %v393
    %v395 = vpop.f32.mrf.mxu0
    %396 = vdwg.mxu0
    %397 = vrot.lane.b32.xlu0 %v273, 112
    %v398 = vpop.permute.xlu0 %397
    %399 = vrot.lane.b32.xlu0 %v273, 80
    %v400 = vpop.permute.xlu0 %399
    %v402 = vsel %vm251, %v398, 0
    %v405 = vsel %vm251, %v400, 0
    %407 = vmatpush.bf16.xpose.msra.mxu0 0
    %408 = vmatpush.bf16.xpose.msra.mxu0 0
    %409 = vmatpush.bf16.xpose.msra.mxu0 0
    %410 = vmatpush.bf16.xpose.msra.mxu0 0
    %411 = vmatpush.bf16.xpose.msra.mxu0 0
    %412 = vmatpush.bf16.xpose.msra.mxu0 0
    %413 = vmatpush.bf16.xpose.msra.mxu0 0
    %414 = vmatpush.bf16.xpose.msra.mxu0 %v405
    %415 = vmatmul.bf16.gmra.mxu0 %v402
    %v416 = vpop.f32.mrf.mxu0
    %v417 = vadd.f32 0.0, %v416
    %v418 = vpop.f32.mrf.mxu0
    %419 = vdwg.mxu0
    %v420 = vmul.f32 %v394, 0.25
    %v421 = vmul.f32 %v417, 0.25
    %v422 = vadd.f32 %v420, %v299
    %v423 = vadd.f32 %v421, %v300
    %v424 = vsel %vm305, %v422, -inf
    %425 = vmax.xlane.f32.xlu0 %v424
    %v426 = vpop.xlane.xlu0 %425
    %v427 = vsel %vm305, %v423, -inf
    %428 = vmax.xlane.f32.xlu0 %v427
    %v429 = vpop.xlane.xlu0 %428
    %v430 = vsub.f32 %v422, %v426
    %v431 = vsub.f32 %v423, %v429
    %v432 = vmul.f32 %v430, 1.442695
    %v433 = vpow.pop %v432
    %v434 = vmul.f32 %v431, 1.442695
    %v435 = vpow.pop %v434
    %v436 = vsel %vm305, %v433, 0.0
    %437 = vadd.xlane.f32.xlu0 %v436
    %v438 = vpop.xlane.xlu0 %437
    %v439 = vsel %vm305, %v435, 0.0
    %440 = vadd.xlane.f32.xlu0 %v439
    %v441 = vpop.xlane.xlu0 %440
    %v442 = vrcp.pop %v438
    %v443 = vrcp.pop %v441
    %v444 = vmul.f32 %v433, %v442
    %v445 = vmul.f32 %v435, %v443
    %v446 = vpack.c.bf16 %v444, %v444
    %v447 = vpack.c.bf16 %v445, %v445
    %448 = vrot.lane.b32.xlu0 %v248, 48
    %v449 = vpop.permute.xlu0 %448
    %v451 = vsel %vm305, %v446, 0
    %v454 = vsel %vm335, %v449, 0
    %456 = vmatpush.bf16.msra.mxu0 0
    %457 = vmatpush.bf16.msra.mxu0 0
    %458 = vmatpush.bf16.msra.mxu0 0
    %459 = vmatpush.bf16.msra.mxu0 0
    %460 = vmatpush.bf16.msra.mxu0 0
    %461 = vmatpush.bf16.msra.mxu0 0
    %462 = vmatpush.bf16.msra.mxu0 0
    %463 = vmatpush.bf16.msra.mxu0 %v454
    %464 = vmatmul.bf16.gmra.mxu0 %v451
    %v465 = vpop.f32.mrf.mxu0
    %v466 = vadd.f32 0.0, %v465
    %v467 = vpop.f32.mrf.mxu0
    %468 = vdwg.mxu0
    %469 = vrot.lane.b32.xlu0 %v273, 48
    %v470 = vpop.permute.xlu0 %469
    %v472 = vsel %vm305, %v447, 0
    %v475 = vsel %vm335, %v470, 0
    %477 = vmatpush.bf16.msra.mxu0 0
    %478 = vmatpush.bf16.msra.mxu0 0
    %479 = vmatpush.bf16.msra.mxu0 0
    %480 = vmatpush.bf16.msra.mxu0 0
    %481 = vmatpush.bf16.msra.mxu0 0
    %482 = vmatpush.bf16.msra.mxu0 0
    %483 = vmatpush.bf16.msra.mxu0 0
    %484 = vmatpush.bf16.msra.mxu0 %v475
    %485 = vmatmul.bf16.gmra.mxu0 %v472
    %v486 = vpop.f32.mrf.mxu0
    %v487 = vadd.f32 0.0, %v486
    %v488 = vpop.f32.mrf.mxu0
    %489 = vdwg.mxu0
    %v490 = vpack.c.bf16 %v487, %v466
    %v493 = vunpack.c.l.b16 %v198
    %v494 = vunpack.c.l.b16 %v199
    %v495 = vpack.c.b16 %v494, %v493
    %v498 = vsel %vm251, %v490, 0
    %500 = vmatpush.bf16.msra.mxu0 0
    %501 = vmatpush.bf16.msra.mxu0 0
    %502 = vmatpush.bf16.msra.mxu0 0
    %503 = vmatpush.bf16.msra.mxu0 0
    %504 = vmatpush.bf16.msra.mxu0 0
    %505 = vmatpush.bf16.msra.mxu0 0
    %506 = vmatpush.bf16.msra.mxu0 0
    %507 = vmatpush.bf16.msra.mxu0 %v495
    %508 = vmatmul.bf16.gmra.mxu0 %v498
    %v509 = vpop.f32.mrf.mxu0
    %v510 = vadd.f32 0.0, %v509
    %v511 = vpop.f32.mrf.mxu0
    %v512 = vadd.f32 0.0, %v511
    %513 = vdwg.mxu0
    %v516 = vunpack.c.l.b16 %v196
    %v517 = vunpack.c.l.b16 %v197
    %v518 = vpack.c.b16 %v517, %v516
    %v521 = vsel %vm251, %v373, 0
    %523 = vmatpush.bf16.msra.mxu0 0
    %524 = vmatpush.bf16.msra.mxu0 0
    %525 = vmatpush.bf16.msra.mxu0 0
    %526 = vmatpush.bf16.msra.mxu0 0
    %527 = vmatpush.bf16.msra.mxu0 0
    %528 = vmatpush.bf16.msra.mxu0 0
    %529 = vmatpush.bf16.msra.mxu0 0
    %530 = vmatpush.bf16.msra.mxu0 %v518
    %531 = vmatmul.bf16.gmra.mxu0 %v521
    %v532 = vpop.f32.mrf.mxu0
    %v533 = vadd.f32 %v510, %v532
    %v534 = vpop.f32.mrf.mxu0
    %v535 = vadd.f32 %v512, %v534
    %536 = vdwg.mxu0
    %v537 = vadd.f32 %v190, %v533
    %v538 = vadd.f32 %v191, %v535
    %v539 = vperm.slane %v212, 1
    %v540 = vadd.f32 %v537, %v539
    %v541 = vadd.f32 %v538, %v539
    %v542 = vsel %vm134, %v540, 0.0
    %543 = vadd.xlane.f32.xlu0 %v542
    %v544 = vpop.xlane.xlu0 %543
    %v545 = vsel %vm134, %v541, 0.0
    %546 = vadd.xlane.f32.xlu0 %v545
    %v547 = vpop.xlane.xlu0 %546
    %v548 = vmul.f32 %v544, %v147
    %v549 = vmul.f32 %v547, %v147
    %v550 = vsub.f32 %v540, %v548
    %v551 = vsub.f32 %v541, %v549
    %v552 = vmul.f32 %v550, %v550
    %v553 = vmul.f32 %v551, %v551
    %v554 = vsel %vm134, %v552, 0.0
    %555 = vadd.xlane.f32.xlu0 %v554
    %v556 = vpop.xlane.xlu0 %555
    %v557 = vsel %vm134, %v553, 0.0
    %558 = vadd.xlane.f32.xlu0 %v557
    %v559 = vpop.xlane.xlu0 %558
    %v560 = vmul.f32 %v556, %v147
    %v561 = vmul.f32 %v559, %v147
    %v562 = vadd.f32 %v560, 1e-12
    %v563 = vadd.f32 %v561, 1e-12
    %v564 = vrsqrt.pop %v562
    %v565 = vmul.f32 %v564, %v562
    %v566 = vmul.f32 %v565, %v564
    %v567 = vmul.f32 0.5, %v566
    %v568 = vsub.f32 1.5, %v567
    %v569 = vmul.f32 %v564, %v568
    %vm570 = vweird.f32 %v562
    %vm571 = vweird.f32 %v564
    %vm572 = vmor %vm570, %vm571
    %v573 = vsel %vm572, %v564, %v569
    %v574 = vrsqrt.pop %v563
    %v575 = vmul.f32 %v574, %v563
    %v576 = vmul.f32 %v575, %v574
    %v577 = vmul.f32 0.5, %v576
    %v578 = vsub.f32 1.5, %v577
    %v579 = vmul.f32 %v574, %v578
    %vm580 = vweird.f32 %v563
    %vm581 = vweird.f32 %v574
    %vm582 = vmor %vm580, %vm581
    %v583 = vsel %vm582, %v574, %v579
    %v584 = vmul.f32 %v550, %v573
    %v585 = vmul.f32 %v551, %v583
    %v586 = vperm.slane %v212, 2
    %v587 = vmul.f32 %v584, %v586
    %v588 = vmul.f32 %v585, %v586
    %v589 = vperm.slane %v212, 3
    %v590 = vadd.f32 %v587, %v589
    %v591 = vadd.f32 %v588, %v589
    %v592 = vpack.c.bf16 %v591, %v590
    %v593 = vperm.slane %v212, 4
    %v598 = vunpack.c.l.b16 %v200
    %v599 = vunpack.c.l.b16 %v201
    %v600 = vunpack.c.l.b16 %v202
    %v601 = vunpack.c.l.b16 %v203
    %v602 = vpack.c.b16 %v599, %v598
    %v603 = vpack.c.b16 %v601, %v600
    %v607 = vsel %vm134, %v592, 0
    %609 = vmatpush.bf16.msra.mxu0 0
    %610 = vmatpush.bf16.msra.mxu0 0
    %611 = vmatpush.bf16.msra.mxu0 0
    %612 = vmatpush.bf16.msra.mxu0 0
    %613 = vmatpush.bf16.msra.mxu0 0
    %614 = vmatpush.bf16.msra.mxu0 0
    %615 = vmatpush.bf16.msra.mxu0 %v603
    %616 = vmatpush.bf16.msra.mxu0 %v602
    %617 = vmatmul.bf16.gmra.mxu0 %v607
    %v618 = vpop.f32.mrf.mxu0
    %v619 = vadd.f32 %v593, %v618
    %v620 = vpop.f32.mrf.mxu0
    %v621 = vadd.f32 %v593, %v620
    %622 = vdwg.mxu0
    %v623 = vmul.f32 %v619, 0.5
    %v624 = vmul.f32 %v621, 0.5
    %v625 = vmul.f32 %v619, 0.044715
    %v626 = vmul.f32 %v621, 0.044715
    %v627 = vmul.f32 %v625, %v619
    %v628 = vmul.f32 %v626, %v621
    %v629 = vmul.f32 %v627, %v619
    %v630 = vmul.f32 %v628, %v621
    %v631 = vadd.f32 %v619, %v629
    %v632 = vadd.f32 %v621, %v630
    %v633 = vmul.f32 %v631, 0.7978846
    %v634 = vmul.f32 %v632, 0.7978846
    %v635 = vtanh.pop %v633
    %v636 = vtanh.pop %v634
    %v637 = vadd.f32 %v635, 1.0
    %v638 = vadd.f32 %v636, 1.0
    %v639 = vmul.f32 %v623, %v637
    %v640 = vmul.f32 %v624, %v638
    %v641 = vpack.c.bf16 %v640, %v639
    %v642 = vperm.slane %v212, 5
    %v651 = vunpack.c.l.b16 %v204
    %v652 = vunpack.c.l.b16 %v205
    %v653 = vunpack.c.l.b16 %v206
    %v654 = vunpack.c.l.b16 %v207
    %v655 = vunpack.c.l.b16 %v208
    %v656 = vunpack.c.l.b16 %v209
    %v657 = vunpack.c.l.b16 %v210
    %v658 = vunpack.c.l.b16 %v211
    %v659 = vpack.c.b16 %v652, %v651
    %v660 = vpack.c.b16 %v654, %v653
    %v661 = vpack.c.b16 %v656, %v655
    %v662 = vpack.c.b16 %v658, %v657
    %vm667 = vcmask 523264
    %v669 = vsel %vm667, %v641, 0
    %671 = vmatpush.bf16.msra.mxu0 0
    %672 = vmatpush.bf16.msra.mxu0 0
    %673 = vmatpush.bf16.msra.mxu0 0
    %674 = vmatpush.bf16.msra.mxu0 0
    %675 = vmatpush.bf16.msra.mxu0 %v662
    %676 = vmatpush.bf16.msra.mxu0 %v661
    %677 = vmatpush.bf16.msra.mxu0 %v660
    %678 = vmatpush.bf16.msra.mxu0 %v659
    %679 = vmatmul.bf16.gmra.mxu0 %v669
    %v680 = vpop.f32.mrf.mxu0
    %v681 = vadd.f32 %v642, %v680
    %v682 = vpop.f32.mrf.mxu0
    %v683 = vadd.f32 %v642, %v682
    %684 = vdwg.mxu0
    %v685 = vadd.f32 %v590, %v681
    %v686 = vadd.f32 %v591, %v683
    %v687 = vsel %vm134, %v685, 0.0
    %688 = vadd.xlane.f32.xlu0 %v687
    %v689 = vpop.xlane.xlu0 %688
    %v690 = vsel %vm134, %v686, 0.0
    %691 = vadd.xlane.f32.xlu0 %v690
    %v692 = vpop.xlane.xlu0 %691
    %v693 = vmul.f32 %v689, %v147
    %v694 = vmul.f32 %v692, %v147
    %v695 = vsub.f32 %v685, %v693
    %v696 = vsub.f32 %v686, %v694
    %v697 = vmul.f32 %v695, %v695
    %v698 = vmul.f32 %v696, %v696
    %v699 = vsel %vm134, %v697, 0.0
    %700 = vadd.xlane.f32.xlu0 %v699
    %v701 = vpop.xlane.xlu0 %700
    %v702 = vsel %vm134, %v698, 0.0
    %703 = vadd.xlane.f32.xlu0 %v702
    %v704 = vpop.xlane.xlu0 %703
    %v705 = vmul.f32 %v701, %v147
    %v706 = vmul.f32 %v704, %v147
    %v707 = vadd.f32 %v705, 1e-12
    %v708 = vadd.f32 %v706, 1e-12
    %v709 = vrsqrt.pop %v707
    %v710 = vmul.f32 %v709, %v707
    %v711 = vmul.f32 %v710, %v709
    %v712 = vmul.f32 0.5, %v711
    %v713 = vsub.f32 1.5, %v712
    %v714 = vmul.f32 %v709, %v713
    %vm715 = vweird.f32 %v707
    %vm716 = vweird.f32 %v709
    %vm717 = vmor %vm715, %vm716
    %v718 = vsel %vm717, %v709, %v714
    %v719 = vrsqrt.pop %v708
    %v720 = vmul.f32 %v719, %v708
    %v721 = vmul.f32 %v720, %v719
    %v722 = vmul.f32 0.5, %v721
    %v723 = vsub.f32 1.5, %v722
    %v724 = vmul.f32 %v719, %v723
    %vm725 = vweird.f32 %v708
    %vm726 = vweird.f32 %v719
    %vm727 = vmor %vm725, %vm726
    %v728 = vsel %vm727, %v719, %v724
    %v729 = vmul.f32 %v695, %v718
    %v730 = vmul.f32 %v696, %v728
    %v731 = vperm.slane %v212, 6
    %v732 = vmul.f32 %v729, %v731
    %v733 = vmul.f32 %v730, %v731
    %v734 = vperm.slane %v212, 7
    %v735 = vadd.f32 %v732, %v734
    %v736 = vadd.f32 %v733, %v734
    %s737 = scalar_lea.vmem %s3, 16
    %v738 = vld [vmem:[%s737] sm:$0xf]
    %v739 = vld [vmem:[%s737 + $0x4] sm:$0xf]
    %v740 = vld [vmem:[%s737 + $0x8] sm:$0xf]
    %v741 = vld [vmem:[%s737 + $0xc] sm:$0xf]
    %s742 = scalar_lea.vmem %s4, 16
    %v743 = vld [vmem:[%s742] sm:$0xf]
    %v744 = vld [vmem:[%s742 + $0x4] sm:$0xf]
    %v745 = vld [vmem:[%s742 + $0x8] sm:$0xf]
    %v746 = vld [vmem:[%s742 + $0xc] sm:$0xf]
    %s747 = scalar_lea.vmem %s5, 16
    %v748 = vld [vmem:[%s747] sm:$0xf]
    %v749 = vld [vmem:[%s747 + $0x4] sm:$0xf]
    %v750 = vld [vmem:[%s747 + $0x8] sm:$0xf]
    %v751 = vld [vmem:[%s747 + $0xc] sm:$0xf]
    %s752 = scalar_lea.vmem %s6, 32
    %v753 = vld [vmem:[%s752] sm:$0xf]
    %v754 = vld [vmem:[%s752 + $0x4] sm:$0xf]
    %v755 = vld [vmem:[%s752 + $0x8] sm:$0xf]
    %v756 = vld [vmem:[%s752 + $0xc] sm:$0xf]
    %v757 = vld [vmem:[%s752 + $0x10] sm:$0xf]
    %v758 = vld [vmem:[%s752 + $0x14] sm:$0xf]
    %v759 = vld [vmem:[%s752 + $0x18] sm:$0xf]
    %v760 = vld [vmem:[%s752 + $0x1c] sm:$0xf]
    %s761 = scalar_lea.vmem [#allocation8], 8
    %v762 = vld [vmem:[%s761] sm:$0xff]
    %v763 = vpack.c.bf16 %v736, %v735
    %v764 = vperm.slane %v762, 0
    %v769 = vunpack.c.l.b16 %v738
    %v770 = vunpack.c.l.b16 %v739
    %v771 = vunpack.c.l.b16 %v740
    %v772 = vunpack.c.l.b16 %v741
    %v773 = vpack.c.b16 %v770, %v769
    %v774 = vpack.c.b16 %v772, %v771
    %v778 = vsel %vm134, %v763, 0
    %780 = vmatpush.bf16.msra.mxu0 0
    %781 = vmatpush.bf16.msra.mxu0 0
    %782 = vmatpush.bf16.msra.mxu0 0
    %783 = vmatpush.bf16.msra.mxu0 0
    %784 = vmatpush.bf16.msra.mxu0 0
    %785 = vmatpush.bf16.msra.mxu0 0
    %786 = vmatpush.bf16.msra.mxu0 %v774
    %787 = vmatpush.bf16.msra.mxu0 %v773
    %788 = vmatmul.bf16.gmra.mxu0 %v778
    %v789 = vpop.f32.mrf.mxu0
    %v790 = vadd.f32 %v764, %v789
    %v791 = vpop.f32.mrf.mxu0
    %v792 = vadd.f32 %v764, %v791
    %793 = vdwg.mxu0
    %v794 = vpack.c.bf16 %v790, %v790
    %v795 = vpack.c.bf16 %v792, %v792
    %v797 = vunpack.c.l.b16 %v794
    %v798 = vpack.c.b16 %v797, %v797
    %799 = vrot.lane.b32.xlu0 %v798, 96
    %v800 = vpop.permute.xlu0 %799
    %v802 = vsel %vm251, %v794, 0
    %v805 = vsel %vm251, %v800, 0
    %807 = vmatpush.bf16.xpose.msra.mxu0 0
    %808 = vmatpush.bf16.xpose.msra.mxu0 0
    %809 = vmatpush.bf16.xpose.msra.mxu0 0
    %810 = vmatpush.bf16.xpose.msra.mxu0 0
    %811 = vmatpush.bf16.xpose.msra.mxu0 0
    %812 = vmatpush.bf16.xpose.msra.mxu0 0
    %813 = vmatpush.bf16.xpose.msra.mxu0 0
    %814 = vmatpush.bf16.xpose.msra.mxu0 %v805
    %815 = vmatmul.bf16.gmra.mxu0 %v802
    %v816 = vpop.f32.mrf.mxu0
    %v817 = vadd.f32 0.0, %v816
    %v818 = vpop.f32.mrf.mxu0
    %819 = vdwg.mxu0
    %v821 = vunpack.c.l.b16 %v795
    %v822 = vpack.c.b16 %v821, %v821
    %823 = vrot.lane.b32.xlu0 %v822, 96
    %v824 = vpop.permute.xlu0 %823
    %v826 = vsel %vm251, %v795, 0
    %v829 = vsel %vm251, %v824, 0
    %831 = vmatpush.bf16.xpose.msra.mxu0 0
    %832 = vmatpush.bf16.xpose.msra.mxu0 0
    %833 = vmatpush.bf16.xpose.msra.mxu0 0
    %834 = vmatpush.bf16.xpose.msra.mxu0 0
    %835 = vmatpush.bf16.xpose.msra.mxu0 0
    %836 = vmatpush.bf16.xpose.msra.mxu0 0
    %837 = vmatpush.bf16.xpose.msra.mxu0 0
    %838 = vmatpush.bf16.xpose.msra.mxu0 %v829
    %839 = vmatmul.bf16.gmra.mxu0 %v826
    %v840 = vpop.f32.mrf.mxu0
    %v841 = vadd.f32 0.0, %v840
    %v842 = vpop.f32.mrf.mxu0
    %843 = vdwg.mxu0
    %v844 = vmul.f32 %v817, 0.25
    %v845 = vmul.f32 %v841, 0.25
    %v846 = vadd.f32 %v844, %v299
    %v847 = vadd.f32 %v845, %v300
    %v848 = vsel %vm305, %v846, -inf
    %849 = vmax.xlane.f32.xlu0 %v848
    %v850 = vpop.xlane.xlu0 %849
    %v851 = vsel %vm305, %v847, -inf
    %852 = vmax.xlane.f32.xlu0 %v851
    %v853 = vpop.xlane.xlu0 %852
    %v854 = vsub.f32 %v846, %v850
    %v855 = vsub.f32 %v847, %v853
    %v856 = vmul.f32 %v854, 1.442695
    %v857 = vpow.pop %v856
    %v858 = vmul.f32 %v855, 1.442695
    %v859 = vpow.pop %v858
    %v860 = vsel %vm305, %v857, 0.0
    %861 = vadd.xlane.f32.xlu0 %v860
    %v862 = vpop.xlane.xlu0 %861
    %v863 = vsel %vm305, %v859, 0.0
    %864 = vadd.xlane.f32.xlu0 %v863
    %v865 = vpop.xlane.xlu0 %864
    %v866 = vrcp.pop %v862
    %v867 = vrcp.pop %v865
    %v868 = vmul.f32 %v857, %v866
    %v869 = vmul.f32 %v859, %v867
    %v870 = vpack.c.bf16 %v868, %v868
    %v871 = vpack.c.bf16 %v869, %v869
    %872 = vrot.lane.b32.xlu0 %v798, 64
    %v873 = vpop.permute.xlu0 %872
    %v875 = vsel %vm305, %v870, 0
    %v878 = vsel %vm335, %v873, 0
    %880 = vmatpush.bf16.msra.mxu0 0
    %881 = vmatpush.bf16.msra.mxu0 0
    %882 = vmatpush.bf16.msra.mxu0 0
    %883 = vmatpush.bf16.msra.mxu0 0
    %884 = vmatpush.bf16.msra.mxu0 0
    %885 = vmatpush.bf16.msra.mxu0 0
    %886 = vmatpush.bf16.msra.mxu0 0
    %887 = vmatpush.bf16.msra.mxu0 %v878
    %888 = vmatmul.bf16.gmra.mxu0 %v875
    %v889 = vpop.f32.mrf.mxu0
    %v890 = vadd.f32 0.0, %v889
    %v891 = vpop.f32.mrf.mxu0
    %892 = vdwg.mxu0
    %893 = vrot.lane.b32.xlu0 %v822, 64
    %v894 = vpop.permute.xlu0 %893
    %v896 = vsel %vm305, %v871, 0
    %v899 = vsel %vm335, %v894, 0
    %901 = vmatpush.bf16.msra.mxu0 0
    %902 = vmatpush.bf16.msra.mxu0 0
    %903 = vmatpush.bf16.msra.mxu0 0
    %904 = vmatpush.bf16.msra.mxu0 0
    %905 = vmatpush.bf16.msra.mxu0 0
    %906 = vmatpush.bf16.msra.mxu0 0
    %907 = vmatpush.bf16.msra.mxu0 0
    %908 = vmatpush.bf16.msra.mxu0 %v899
    %909 = vmatmul.bf16.gmra.mxu0 %v896
    %v910 = vpop.f32.mrf.mxu0
    %v911 = vadd.f32 0.0, %v910
    %v912 = vpop.f32.mrf.mxu0
    %913 = vdwg.mxu0
    %v914 = vpack.c.bf16 %v911, %v890
    %915 = vrot.lane.b32.xlu0 %v798, 112
    %v916 = vpop.permute.xlu0 %915
    %917 = vrot.lane.b32.xlu0 %v798, 80
    %v918 = vpop.permute.xlu0 %917
    %v920 = vsel %vm251, %v916, 0
    %v923 = vsel %vm251, %v918, 0
    %925 = vmatpush.bf16.xpose.msra.mxu0 0
    %926 = vmatpush.bf16.xpose.msra.mxu0 0
    %927 = vmatpush.bf16.xpose.msra.mxu0 0
    %928 = vmatpush.bf16.xpose.msra.mxu0 0
    %929 = vmatpush.bf16.xpose.msra.mxu0 0
    %930 = vmatpush.bf16.xpose.msra.mxu0 0
    %931 = vmatpush.bf16.xpose.msra.mxu0 0
    %932 = vmatpush.bf16.xpose.msra.mxu0 %v923
    %933 = vmatmul.bf16.gmra.mxu0 %v920
    %v934 = vpop.f32.mrf.mxu0
    %v935 = vadd.f32 0.0, %v934
    %v936 = vpop.f32.mrf.mxu0
    %937 = vdwg.mxu0
    %938 = vrot.lane.b32.xlu0 %v822, 112
    %v939 = vpop.permute.xlu0 %938
    %940 = vrot.lane.b32.xlu0 %v822, 80
    %v941 = vpop.permute.xlu0 %940
    %v943 = vsel %vm251, %v939, 0
    %v946 = vsel %vm251, %v941, 0
    %948 = vmatpush.bf16.xpose.msra.mxu0 0
    %949 = vmatpush.bf16.xpose.msra.mxu0 0
    %950 = vmatpush.bf16.xpose.msra.mxu0 0
    %951 = vmatpush.bf16.xpose.msra.mxu0 0
    %952 = vmatpush.bf16.xpose.msra.mxu0 0
    %953 = vmatpush.bf16.xpose.msra.mxu0 0
    %954 = vmatpush.bf16.xpose.msra.mxu0 0
    %955 = vmatpush.bf16.xpose.msra.mxu0 %v946
    %956 = vmatmul.bf16.gmra.mxu0 %v943
    %v957 = vpop.f32.mrf.mxu0
    %v958 = vadd.f32 0.0, %v957
    %v959 = vpop.f32.mrf.mxu0
    %960 = vdwg.mxu0
    %v961 = vmul.f32 %v935, 0.25
    %v962 = vmul.f32 %v958, 0.25
    %v963 = vadd.f32 %v961, %v299
    %v964 = vadd.f32 %v962, %v300
    %v965 = vsel %vm305, %v963, -inf
    %966 = vmax.xlane.f32.xlu0 %v965
    %v967 = vpop.xlane.xlu0 %966
    %v968 = vsel %vm305, %v964, -inf
    %969 = vmax.xlane.f32.xlu0 %v968
    %v970 = vpop.xlane.xlu0 %969
    %v971 = vsub.f32 %v963, %v967
    %v972 = vsub.f32 %v964, %v970
    %v973 = vmul.f32 %v971, 1.442695
    %v974 = vpow.pop %v973
    %v975 = vmul.f32 %v972, 1.442695
    %v976 = vpow.pop %v975
    %v977 = vsel %vm305, %v974, 0.0
    %978 = vadd.xlane.f32.xlu0 %v977
    %v979 = vpop.xlane.xlu0 %978
    %v980 = vsel %vm305, %v976, 0.0
    %981 = vadd.xlane.f32.xlu0 %v980
    %v982 = vpop.xlane.xlu0 %981
    %v983 = vrcp.pop %v979
    %v984 = vrcp.pop %v982
    %v985 = vmul.f32 %v974, %v983
    %v986 = vmul.f32 %v976, %v984
    %v987 = vpack.c.bf16 %v985, %v985
    %v988 = vpack.c.bf16 %v986, %v986
    %989 = vrot.lane.b32.xlu0 %v798, 48
    %v990 = vpop.permute.xlu0 %989
    %v992 = vsel %vm305, %v987, 0
    %v995 = vsel %vm335, %v990, 0
    %997 = vmatpush.bf16.msra.mxu0 0
    %998 = vmatpush.bf16.msra.mxu0 0
    %999 = vmatpush.bf16.msra.mxu0 0
    %1000 = vmatpush.bf16.msra.mxu0 0
    %1001 = vmatpush.bf16.msra.mxu0 0
    %1002 = vmatpush.bf16.msra.mxu0 0
    %1003 = vmatpush.bf16.msra.mxu0 0
    %1004 = vmatpush.bf16.msra.mxu0 %v995
    %1005 = vmatmul.bf16.gmra.mxu0 %v992
    %v1006 = vpop.f32.mrf.mxu0
    %v1007 = vadd.f32 0.0, %v1006
    %v1008 = vpop.f32.mrf.mxu0
    %1009 = vdwg.mxu0
    %1010 = vrot.lane.b32.xlu0 %v822, 48
    %v1011 = vpop.permute.xlu0 %1010
    %v1013 = vsel %vm305, %v988, 0
    %v1016 = vsel %vm335, %v1011, 0
    %1018 = vmatpush.bf16.msra.mxu0 0
    %1019 = vmatpush.bf16.msra.mxu0 0
    %1020 = vmatpush.bf16.msra.mxu0 0
    %1021 = vmatpush.bf16.msra.mxu0 0
    %1022 = vmatpush.bf16.msra.mxu0 0
    %1023 = vmatpush.bf16.msra.mxu0 0
    %1024 = vmatpush.bf16.msra.mxu0 0
    %1025 = vmatpush.bf16.msra.mxu0 %v1016
    %1026 = vmatmul.bf16.gmra.mxu0 %v1013
    %v1027 = vpop.f32.mrf.mxu0
    %v1028 = vadd.f32 0.0, %v1027
    %v1029 = vpop.f32.mrf.mxu0
    %1030 = vdwg.mxu0
    %v1031 = vpack.c.bf16 %v1028, %v1007
    %v1034 = vunpack.c.l.b16 %v745
    %v1035 = vunpack.c.l.b16 %v746
    %v1036 = vpack.c.b16 %v1035, %v1034
    %v1039 = vsel %vm251, %v1031, 0
    %1041 = vmatpush.bf16.msra.mxu0 0
    %1042 = vmatpush.bf16.msra.mxu0 0
    %1043 = vmatpush.bf16.msra.mxu0 0
    %1044 = vmatpush.bf16.msra.mxu0 0
    %1045 = vmatpush.bf16.msra.mxu0 0
    %1046 = vmatpush.bf16.msra.mxu0 0
    %1047 = vmatpush.bf16.msra.mxu0 0
    %1048 = vmatpush.bf16.msra.mxu0 %v1036
    %1049 = vmatmul.bf16.gmra.mxu0 %v1039
    %v1050 = vpop.f32.mrf.mxu0
    %v1051 = vadd.f32 0.0, %v1050
    %v1052 = vpop.f32.mrf.mxu0
    %v1053 = vadd.f32 0.0, %v1052
    %1054 = vdwg.mxu0
    %v1057 = vunpack.c.l.b16 %v743
    %v1058 = vunpack.c.l.b16 %v744
    %v1059 = vpack.c.b16 %v1058, %v1057
    %v1062 = vsel %vm251, %v914, 0
    %1064 = vmatpush.bf16.msra.mxu0 0
    %1065 = vmatpush.bf16.msra.mxu0 0
    %1066 = vmatpush.bf16.msra.mxu0 0
    %1067 = vmatpush.bf16.msra.mxu0 0
    %1068 = vmatpush.bf16.msra.mxu0 0
    %1069 = vmatpush.bf16.msra.mxu0 0
    %1070 = vmatpush.bf16.msra.mxu0 0
    %1071 = vmatpush.bf16.msra.mxu0 %v1059
    %1072 = vmatmul.bf16.gmra.mxu0 %v1062
    %v1073 = vpop.f32.mrf.mxu0
    %v1074 = vadd.f32 %v1051, %v1073
    %v1075 = vpop.f32.mrf.mxu0
    %v1076 = vadd.f32 %v1053, %v1075
    %1077 = vdwg.mxu0
    %v1078 = vadd.f32 %v735, %v1074
    %v1079 = vadd.f32 %v736, %v1076
    %v1080 = vperm.slane %v762, 1
    %v1081 = vadd.f32 %v1078, %v1080
    %v1082 = vadd.f32 %v1079, %v1080
    %v1083 = vsel %vm134, %v1081, 0.0
    %1084 = vadd.xlane.f32.xlu0 %v1083
    %v1085 = vpop.xlane.xlu0 %1084
    %v1086 = vsel %vm134, %v1082, 0.0
    %1087 = vadd.xlane.f32.xlu0 %v1086
    %v1088 = vpop.xlane.xlu0 %1087
    %v1089 = vmul.f32 %v1085, %v147
    %v1090 = vmul.f32 %v1088, %v147
    %v1091 = vsub.f32 %v1081, %v1089
    %v1092 = vsub.f32 %v1082, %v1090
    %v1093 = vmul.f32 %v1091, %v1091
    %v1094 = vmul.f32 %v1092, %v1092
    %v1095 = vsel %vm134, %v1093, 0.0
    %1096 = vadd.xlane.f32.xlu0 %v1095
    %v1097 = vpop.xlane.xlu0 %1096
    %v1098 = vsel %vm134, %v1094, 0.0
    %1099 = vadd.xlane.f32.xlu0 %v1098
    %v1100 = vpop.xlane.xlu0 %1099
    %v1101 = vmul.f32 %v1097, %v147
    %v1102 = vmul.f32 %v1100, %v147
    %v1103 = vadd.f32 %v1101, 1e-12
    %v1104 = vadd.f32 %v1102, 1e-12
    %v1105 = vrsqrt.pop %v1103
    %v1106 = vmul.f32 %v1105, %v1103
    %v1107 = vmul.f32 %v1106, %v1105
    %v1108 = vmul.f32 0.5, %v1107
    %v1109 = vsub.f32 1.5, %v1108
    %v1110 = vmul.f32 %v1105, %v1109
    %vm1111 = vweird.f32 %v1103
    %vm1112 = vweird.f32 %v1105
    %vm1113 = vmor %vm1111, %vm1112
    %v1114 = vsel %vm1113, %v1105, %v1110
    %v1115 = vrsqrt.pop %v1104
    %v1116 = vmul.f32 %v1115, %v1104
    %v1117 = vmul.f32 %v1116, %v1115
    %v1118 = vmul.f32 0.5, %v1117
    %v1119 = vsub.f32 1.5, %v1118
    %v1120 = vmul.f32 %v1115, %v1119
    %vm1121 = vweird.f32 %v1104
    %vm1122 = vweird.f32 %v1115
    %vm1123 = vmor %vm1121, %vm1122
    %v1124 = vsel %vm1123, %v1115, %v1120
    %v1125 = vmul.f32 %v1091, %v1114
    %v1126 = vmul.f32 %v1092, %v1124
    %v1127 = vperm.slane %v762, 2
    %v1128 = vmul.f32 %v1125, %v1127
    %v1129 = vmul.f32 %v1126, %v1127
    %v1130 = vperm.slane %v762, 3
    %v1131 = vadd.f32 %v1128, %v1130
    %v1132 = vadd.f32 %v1129, %v1130
    %v1133 = vpack.c.bf16 %v1132, %v1131
    %v1134 = vperm.slane %v762, 4
    %v1139 = vunpack.c.l.b16 %v748
    %v1140 = vunpack.c.l.b16 %v749
    %v1141 = vunpack.c.l.b16 %v750
    %v1142 = vunpack.c.l.b16 %v751
    %v1143 = vpack.c.b16 %v1140, %v1139
    %v1144 = vpack.c.b16 %v1142, %v1141
    %v1148 = vsel %vm134, %v1133, 0
    %1150 = vmatpush.bf16.msra.mxu0 0
    %1151 = vmatpush.bf16.msra.mxu0 0
    %1152 = vmatpush.bf16.msra.mxu0 0
    %1153 = vmatpush.bf16.msra.mxu0 0
    %1154 = vmatpush.bf16.msra.mxu0 0
    %1155 = vmatpush.bf16.msra.mxu0 0
    %1156 = vmatpush.bf16.msra.mxu0 %v1144
    %1157 = vmatpush.bf16.msra.mxu0 %v1143
    %1158 = vmatmul.bf16.gmra.mxu0 %v1148
    %v1159 = vpop.f32.mrf.mxu0
    %v1160 = vadd.f32 %v1134, %v1159
    %v1161 = vpop.f32.mrf.mxu0
    %v1162 = vadd.f32 %v1134, %v1161
    %1163 = vdwg.mxu0
    %v1164 = vmul.f32 %v1160, 0.5
    %v1165 = vmul.f32 %v1162, 0.5
    %v1166 = vmul.f32 %v1160, 0.044715
    %v1167 = vmul.f32 %v1162, 0.044715
    %v1168 = vmul.f32 %v1166, %v1160
    %v1169 = vmul.f32 %v1167, %v1162
    %v1170 = vmul.f32 %v1168, %v1160
    %v1171 = vmul.f32 %v1169, %v1162
    %v1172 = vadd.f32 %v1160, %v1170
    %v1173 = vadd.f32 %v1162, %v1171
    %v1174 = vmul.f32 %v1172, 0.7978846
    %v1175 = vmul.f32 %v1173, 0.7978846
    %v1176 = vtanh.pop %v1174
    %v1177 = vtanh.pop %v1175
    %v1178 = vadd.f32 %v1176, 1.0
    %v1179 = vadd.f32 %v1177, 1.0
    %v1180 = vmul.f32 %v1164, %v1178
    %v1181 = vmul.f32 %v1165, %v1179
    %v1182 = vpack.c.bf16 %v1181, %v1180
    %v1183 = vperm.slane %v762, 5
    %v1192 = vunpack.c.l.b16 %v753
    %v1193 = vunpack.c.l.b16 %v754
    %v1194 = vunpack.c.l.b16 %v755
    %v1195 = vunpack.c.l.b16 %v756
    %v1196 = vunpack.c.l.b16 %v757
    %v1197 = vunpack.c.l.b16 %v758
    %v1198 = vunpack.c.l.b16 %v759
    %v1199 = vunpack.c.l.b16 %v760
    %v1200 = vpack.c.b16 %v1193, %v1192
    %v1201 = vpack.c.b16 %v1195, %v1194
    %v1202 = vpack.c.b16 %v1197, %v1196
    %v1203 = vpack.c.b16 %v1199, %v1198
    %v1209 = vsel %vm667, %v1182, 0
    %1211 = vmatpush.bf16.msra.mxu0 0
    %1212 = vmatpush.bf16.msra.mxu0 0
    %1213 = vmatpush.bf16.msra.mxu0 0
    %1214 = vmatpush.bf16.msra.mxu0 0
    %1215 = vmatpush.bf16.msra.mxu0 %v1203
    %1216 = vmatpush.bf16.msra.mxu0 %v1202
    %1217 = vmatpush.bf16.msra.mxu0 %v1201
    %1218 = vmatpush.bf16.msra.mxu0 %v1200
    %1219 = vmatmul.bf16.gmra.mxu0 %v1209
    %v1220 = vpop.f32.mrf.mxu0
    %v1221 = vadd.f32 %v1183, %v1220
    %v1222 = vpop.f32.mrf.mxu0
    %v1223 = vadd.f32 %v1183, %v1222
    %1224 = vdwg.mxu0
    %v1225 = vadd.f32 %v1131, %v1221
    %v1226 = vadd.f32 %v1132, %v1223
    %v1227 = vsel %vm134, %v1225, 0.0
    %1228 = vadd.xlane.f32.xlu0 %v1227
    %v1229 = vpop.xlane.xlu0 %1228
    %v1230 = vsel %vm134, %v1226, 0.0
    %1231 = vadd.xlane.f32.xlu0 %v1230
    %v1232 = vpop.xlane.xlu0 %1231
    %v1233 = vmul.f32 %v1229, %v147
    %v1234 = vmul.f32 %v1232, %v147
    %v1235 = vsub.f32 %v1225, %v1233
    %v1236 = vsub.f32 %v1226, %v1234
    %v1237 = vmul.f32 %v1235, %v1235
    %v1238 = vmul.f32 %v1236, %v1236
    %v1239 = vsel %vm134, %v1237, 0.0
    %1240 = vadd.xlane.f32.xlu0 %v1239
    %v1241 = vpop.xlane.xlu0 %1240
    %v1242 = vsel %vm134, %v1238, 0.0
    %1243 = vadd.xlane.f32.xlu0 %v1242
    %v1244 = vpop.xlane.xlu0 %1243
    %v1245 = vmul.f32 %v1241, %v147
    %v1246 = vmul.f32 %v1244, %v147
    %v1247 = vadd.f32 %v1245, 1e-12
    %v1248 = vadd.f32 %v1246, 1e-12
    %v1249 = vrsqrt.pop %v1247
    %v1250 = vmul.f32 %v1249, %v1247
    %v1251 = vmul.f32 %v1250, %v1249
    %v1252 = vmul.f32 0.5, %v1251
    %v1253 = vsub.f32 1.5, %v1252
    %v1254 = vmul.f32 %v1249, %v1253
    %vm1255 = vweird.f32 %v1247
    %vm1256 = vweird.f32 %v1249
    %vm1257 = vmor %vm1255, %vm1256
    %v1258 = vsel %vm1257, %v1249, %v1254
    %v1259 = vrsqrt.pop %v1248
    %v1260 = vmul.f32 %v1259, %v1248
    %v1261 = vmul.f32 %v1260, %v1259
    %v1262 = vmul.f32 0.5, %v1261
    %v1263 = vsub.f32 1.5, %v1262
    %v1264 = vmul.f32 %v1259, %v1263
    %vm1265 = vweird.f32 %v1248
    %vm1266 = vweird.f32 %v1259
    %vm1267 = vmor %vm1265, %vm1266
    %v1268 = vsel %vm1267, %v1259, %v1264
    %v1269 = vmul.f32 %v1235, %v1258
    %v1270 = vmul.f32 %v1236, %v1268
    %v1271 = vperm.slane %v762, 6
    %v1272 = vmul.f32 %v1269, %v1271
    %v1273 = vmul.f32 %v1270, %v1271
    %v1274 = vperm.slane %v762, 7
    %v1275 = vadd.f32 %v1272, %v1274
    %v1276 = vadd.f32 %v1273, %v1274
    %v1277 = vpack.c.bf16 %v1276, %v1275
    %v1278 = vld [vmem:[#allocation10] sm:$0xf]
    %v1279 = vld [vmem:[#allocation10 + $0x4] sm:$0xf]
    %v1280 = vld [vmem:[#allocation10 + $0x8] sm:$0xf]
    %v1281 = vld [vmem:[#allocation10 + $0xc] sm:$0xf]
    %v1282 = vperm.slane %v129, 2
    %v1287 = vunpack.c.l.b16 %v1278
    %v1288 = vunpack.c.l.b16 %v1279
    %v1289 = vunpack.c.l.b16 %v1280
    %v1290 = vunpack.c.l.b16 %v1281
    %v1291 = vpack.c.b16 %v1288, %v1287
    %v1292 = vpack.c.b16 %v1290, %v1289
    %v1296 = vsel %vm134, %v1277, 0
    %1298 = vmatpush.bf16.msra.mxu0 0
    %1299 = vmatpush.bf16.msra.mxu0 0
    %1300 = vmatpush.bf16.msra.mxu0 0
    %1301 = vmatpush.bf16.msra.mxu0 0
    %1302 = vmatpush.bf16.msra.mxu0 0
    %1303 = vmatpush.bf16.msra.mxu0 0
    %1304 = vmatpush.bf16.msra.mxu0 %v1292
    %1305 = vmatpush.bf16.msra.mxu0 %v1291
    %1306 = vmatmul.bf16.gmra.mxu0 %v1296
    %v1307 = vpop.f32.mrf.mxu0
    %v1308 = vadd.f32 %v1282, %v1307
    %v1309 = vpop.f32.mrf.mxu0
    %v1310 = vadd.f32 %v1282, %v1309
    %1311 = vdwg.mxu0
    %v1312 = vtanh.pop %v1308
    %v1313 = vtanh.pop %v1310
    %v1314 = vpack.c.bf16 %v1313, %v1312
    %v1315 = vld [vmem:[#allocation11] sm:$0xf]
    %v1316 = vld [vmem:[#allocation11 + $0x4] sm:$0xf]
    %v1317 = vld [vmem:[#allocation11 + $0x8] sm:$0xf]
    %v1318 = vld [vmem:[#allocation11 + $0xc] sm:$0xf]
    %v1319 = vperm.slane %v129, 3
    %v1324 = vunpack.c.l.b16 %v1315
    %v1325 = vunpack.c.l.b16 %v1316
    %v1326 = vunpack.c.l.b16 %v1317
    %v1327 = vunpack.c.l.b16 %v1318
    %v1328 = vpack.c.b16 %v1325, %v1324
    %v1329 = vpack.c.b16 %v1327, %v1326
    %v1333 = vsel %vm134, %v1314, 0
    %1335 = vmatpush.bf16.msra.mxu0 0
    %1336 = vmatpush.bf16.msra.mxu0 0
    %1337 = vmatpush.bf16.msra.mxu0 0
    %1338 = vmatpush.bf16.msra.mxu0 0
    %1339 = vmatpush.bf16.msra.mxu0 0
    %1340 = vmatpush.bf16.msra.mxu0 0
    %1341 = vmatpush.bf16.msra.mxu0 %v1329
    %1342 = vmatpush.bf16.msra.mxu0 %v1328
    %1343 = vmatmul.bf16.gmra.mxu0 %v1333
    %v1344 = vpop.f32.mrf.mxu0
    %v1345 = vadd.f32 %v1319, %v1344
    %v1346 = vpop.f32.mrf.mxu0
    %v1347 = vadd.f32 %v1319, %v1346
    %1348 = vdwg.mxu0
    %1349 = vst [vmem:[#allocation13] sm:$0xff] %v1345
    %1350 = vst [vmem:[#allocation13 + $0x8] sm:$0xff] %v1347
    // Predicated region
    $region66: #{tpu_custom_call.1} parent=1 // pred_check
      _
    $region67: #{tpu_custom_call.1} parent=1 // pred_check_branch
      %1352 = sbr.rel (0) target = $region69
    $region68: #{tpu_custom_call.1} parent=1 // pred_region
      %1354 = vsyncadd [#allocation4], 0
      %s1355 = sshll.u32 [#allocation13], 4
      %s1356 = int_to_ptr.vmem [resolvable:$true] %s1355
      %s1357 = sshll.u32 %s10, 4
      %s1358 = int_to_ptr.hbm [resolvable:$true] %s1357
      %1363 = dma.vmem_to_hbm [thread:$0]  %s1356, 256, %s1358, [#allocation4], 128, 128, 8
    $region69: #{tpu_custom_call.1} parent=1 // pred_fallthru
      _
    // Predicated region
    $region70: #{tpu_custom_call.1} parent=1 // pred_check
      _
    $region71: #{tpu_custom_call.1} parent=1 // pred_check_branch
      %1365 = sbr.rel (0) target = $region73
    $region72: #{tpu_custom_call.1} parent=1 // pred_region
      %1367 = dma.done [#allocation4], 256
    $region73: #{tpu_custom_call.1} parent=1 // pred_fallthru
      _
    %1368 = vsyncpa [#allocation3], 1
    %1369 = vsyncpa [#allocation6], 1
    %1370 = vsyncpa [#allocation9], 1
    %1371 = vsyncpa [#allocation12], 1
    %1372 = vsyncpa [#allocation4], 1

</llo_original>
